<compile_context>
chip_gen: v6e
topology: v6e:2x2x1
jax: 0.10.0
libtpu: 0.0.40
codegen_flags: <defaults>
</compile_context>

<pallas_src>
import functools

import jax
import jax.numpy as jnp
from jax.experimental import pallas as pl
from jax.experimental.pallas import tpu as pltpu


_LANE = 128
_VMEM_LIMIT_BYTES = 32 * 1024 * 1024   # explicit budget, safe on v5e/v6e/v7x


def _round_up(n, m):
    return ((n + m - 1) // m) * m


def _pick_tile(dim, candidates):
    for c in candidates:
        if c <= dim and dim % c == 0:
            return c
    return dim


# ---------------------------------------------------------------------------
# Pallas kernels
# ---------------------------------------------------------------------------
def _matmul_kernel(*refs, apply_relu, has_bias):
    """K-tiled  out = act(A @ B [+ bias])  with f32 VMEM accumulator."""
    if has_bias:
        a_ref, b_ref, bias_ref, o_ref, acc_ref = refs
    else:
        a_ref, b_ref, o_ref, acc_ref = refs
        bias_ref = None

    k = pl.program_id(1)

    @pl.when(k == 0)
    def _():
        acc_ref[...] = jnp.zeros_like(acc_ref)

    acc_ref[...] += jnp.dot(a_ref[...], b_ref[...],
                            preferred_element_type=jnp.float32)

    @pl.when(k == pl.num_programs(1) - 1)
    def _():
        acc = acc_ref[...]
        if has_bias:
            acc = acc + bias_ref[...]
        if apply_relu:
            acc = jnp.maximum(acc, 0.0)
        o_ref[...] = acc.astype(o_ref.dtype)


def matmul(a, b, bias=None, *, apply_relu=False, out_dtype=jnp.float32,
           tile_m=None, tile_k=None):
    """Tiled (M, K) matmul + optional bias/ReLU. Shapes must be (8,128)-padded."""
    M, K = a.shape
    K2, N = b.shape
    assert K == K2
    tm = tile_m or _pick_tile(M, (256, 128))
    tk = tile_k or _pick_tile(K, (2048, 1024, 512, 256, 128))
    grid = (M // tm, K // tk)

    has_bias = bias is not None
    in_specs = [pl.BlockSpec((tm, tk), lambda i, k: (i, k)),
                pl.BlockSpec((tk, N), lambda i, k: (k, 0))]
    args = [a, b]
    if has_bias:
        in_specs.append(pl.BlockSpec((1, N), lambda i, k: (0, 0)))
        args.append(bias)

    return pl.pallas_call(
        functools.partial(_matmul_kernel, apply_relu=apply_relu,
                          has_bias=has_bias),
        out_shape=jax.ShapeDtypeStruct((M, N), out_dtype),
        grid_spec=pltpu.PrefetchScalarGridSpec(
            num_scalar_prefetch=0,
            grid=grid,
            in_specs=in_specs,
            out_specs=pl.BlockSpec((tm, N), lambda i, k: (i, 0)),
            scratch_shapes=[pltpu.VMEM((tm, N), jnp.float32)]),
        compiler_params=pltpu.CompilerParams(
            dimension_semantics=("parallel", "arbitrary"),
            vmem_limit_bytes=_VMEM_LIMIT_BYTES),
    )(*args)


def _gcn_layer_jk_kernel(a_ref, hw_ref, bias_ref, jk_in_ref,
                         h_ref, jk_ref, acc_ref, *, jk_op, jk_scale):
    """h = relu(Â_tile @ HW + b); fused running JK (sum/mean/max) update."""
    k = pl.program_id(1)

    @pl.when(k == 0)
    def _():
        acc_ref[...] = jnp.zeros_like(acc_ref)

    acc_ref[...] += jnp.dot(a_ref[...], hw_ref[...],
                            preferred_element_type=jnp.float32)

    @pl.when(k == pl.num_programs(1) - 1)
    def _():
        h = jnp.maximum(acc_ref[...] + bias_ref[...], 0.0)   # bias + ReLU (f32)
        h_ref[...] = h.astype(h_ref.dtype)
        if jk_op == "max":
            # relu(.) >= 0, so a zero-initialized running max is exact.
            jk_ref[...] = jnp.maximum(jk_in_ref[...], h)
        elif jk_op == "concat":
            jk_ref[...] = h           # unused; concat handled in the wrapper
        else:                         # "sum" / "mean" (1/L folded into jk_scale)
            jk_ref[...] = jk_in_ref[...] + h * jk_scale


def gcn_layer(a_norm, hw, bias, jk_prev, *, jk_op, jk_scale,
              tile_m=None, tile_k=None):
    """One GCN layer (Â @ HW + b, ReLU) with fused JK accumulation."""
    Np, Kp = a_norm.shape
    H = hw.shape[1]
    tm = tile_m or _pick_tile(Np, (256, 128))
    tk = tile_k or _pick_tile(Kp, (2048, 1024, 512, 256, 128))
    grid = (Np // tm, Kp // tk)

    return pl.pallas_call(
        functools.partial(_gcn_layer_jk_kernel, jk_op=jk_op, jk_scale=jk_scale),
        out_shape=(jax.ShapeDtypeStruct((Np, H), jnp.bfloat16),   # h (next layer)
                   jax.ShapeDtypeStruct((Np, H), jnp.float32)),   # running JK
        grid_spec=pltpu.PrefetchScalarGridSpec(
            num_scalar_prefetch=0,
            grid=grid,
            in_specs=[pl.BlockSpec((tm, tk), lambda i, k: (i, k)),  # Â tile
                      pl.BlockSpec((tk, H), lambda i, k: (k, 0)),   # HW K-slab
                      pl.BlockSpec((1, H), lambda i, k: (0, 0)),    # bias
                      pl.BlockSpec((tm, H), lambda i, k: (i, 0))],  # jk in
            out_specs=[pl.BlockSpec((tm, H), lambda i, k: (i, 0)),
                       pl.BlockSpec((tm, H), lambda i, k: (i, 0))],
            scratch_shapes=[pltpu.VMEM((tm, H), jnp.float32)]),
        compiler_params=pltpu.CompilerParams(
            dimension_semantics=("parallel", "arbitrary"),
            vmem_limit_bytes=_VMEM_LIMIT_BYTES),
        input_output_aliases={3: 1},    # jk_prev buffer -> jk output (in place)
    )(a_norm, hw, bias, jk_prev)


# ---------------------------------------------------------------------------
# Model: parameters + forward
# ---------------------------------------------------------------------------
def init_params(key, in_dim, hidden_dim, out_dim, num_layers, mode="mean"):
    keys = jax.random.split(key, num_layers + 1)
    layers = []
    d = in_dim
    for i in range(num_layers):
        wk, bk = jax.random.split(keys[i])
        scale = 1.0 / jnp.sqrt(jnp.float32(d))
        w = jax.random.uniform(wk, (d, hidden_dim), jnp.float32, -scale, scale)
        b = jax.random.uniform(bk, (hidden_dim,), jnp.float32, -scale, scale)
        layers.append((w, b))
        d = hidden_dim
    jk_dim = hidden_dim * num_layers if mode == "concat" else hidden_dim
    wk, bk = jax.random.split(keys[-1])
    scale = 1.0 / jnp.sqrt(jnp.float32(jk_dim))
    w_out = jax.random.uniform(wk, (jk_dim, out_dim), jnp.float32, -scale, scale)
    b_out = jax.random.uniform(bk, (out_dim,), jnp.float32, -scale, scale)
    return {"layers": layers, "out": (w_out, b_out)}


def gcn_with_jk_forward(params, x, edge_index, *, mode="mean"):
    N, D = x.shape
    layers = params["layers"]
    w_out, b_out = params["out"]
    L = len(layers)
    H = layers[0][0].shape[1]
    O = w_out.shape[1]

    # padded, lane-dense sizes (multiples of 128)
    Np = _round_up(N, _LANE)
    Dp = _round_up(D, _LANE)
    Hp = _round_up(H, _LANE)
    Op = _round_up(O, _LANE)

    # --- glue: Â = D^{-1/2}(A + I)D^{-1/2}, dense, zero-padded, bf16 ---------
    # (multi-edges deduplicated, as in the previous accepted version)
    src, dst = edge_index[0], edge_index[1]
    adj = jnp.zeros((N, N), jnp.float32).at[dst, src].set(1.0)   # src -> dst
    adj = jnp.maximum(adj, jnp.eye(N, dtype=jnp.float32))        # self loops
    deg = jnp.sum(adj, axis=1)
    dinv = jnp.where(deg > 0, 1.0 / jnp.sqrt(deg), 0.0)
    a_norm = adj * dinv[:, None] * dinv[None, :]
    a_norm = jnp.pad(a_norm, ((0, Np - N), (0, Np - N))).astype(jnp.bfloat16)

    # --- GCN layers (Pallas, K-tiled, bf16 inputs / f32 accumulation) -------
    # TODO(synk): dropout / norm / residual are module defaults (off) -> identity.
    h = jnp.pad(x.astype(jnp.float32),
                ((0, Np - N), (0, Dp - D))).astype(jnp.bfloat16)
    jk = jnp.zeros((Np, Hp), jnp.float32)         # running JK accumulator
    jk_scale = (1.0 / L) if mode == "mean" else 1.0
    layer_outs = []

    for (w, b) in layers:
        d = w.shape[0]
        dp = _round_up(d, _LANE)
        w_p = jnp.pad(w, ((0, dp - d), (0, Hp - H))).astype(jnp.bfloat16)
        b_p = jnp.pad(b, (0, Hp - H)).astype(jnp.float32)[None, :]

        hw = matmul(h, w_p, out_dtype=jnp.bfloat16)                  # X @ W
        h, jk = gcn_layer(a_norm, hw, b_p, jk,                       # relu(Â·+b)
                          jk_op=mode, jk_scale=jk_scale)             # + JK acc
        layer_outs.append(h)

    # --- Jumping Knowledge + final linear ------------------------------------
    b_out_p = jnp.pad(b_out, (0, Op - O)).astype(jnp.float32)[None, :]
    if mode == "concat":
        # lane-dense per-layer blocks concatenated along features (pure copy)
        jk_feat = jnp.concatenate(layer_outs, axis=1)                # (Np, L*Hp)
        w_out_p = jnp.zeros((L * Hp, Op), jnp.float32)
        for l in range(L):
            w_out_p = w_out_p.at[l * Hp:l * Hp + H, :O].set(
                w_out[l * H:(l + 1) * H, :])
        out_p = matmul(jk_feat, w_out_p.astype(jnp.bfloat16), b_out_p)
    else:
        w_out_p = jnp.pad(w_out, ((0, Hp - H), (0, Op - O)))
        out_p = matmul(jk, w_out_p, b_out_p)

    return out_p[:N, :O]


# ---------------------------------------------------------------------------
if __name__ == "__main__":
    IN_DIM, HIDDEN_DIM, OUT_DIM, NUM_LAYERS = 16, 32, 16, 3
    NUM_NODES, NUM_EDGES = 128, 512
    MODE = "mean"

    key = jax.random.PRNGKey(0)
    kx, ke, kp = jax.random.split(key, 3)

    x = jax.random.normal(kx, (NUM_NODES, IN_DIM), jnp.float32)
    edge_index = jax.random.randint(ke, (2, NUM_EDGES), 0, NUM_NODES, jnp.int32)

    params = init_params(kp, IN_DIM, HIDDEN_DIM, OUT_DIM, NUM_LAYERS, mode=MODE)

    fwd = jax.jit(functools.partial(gcn_with_jk_forward, mode=MODE))
    out = fwd(params, x, edge_index)
    out = jax.block_until_ready(out)
    assert out.shape == (NUM_NODES, OUT_DIM)
    assert bool(jnp.all(jnp.isfinite(out)))
    print("KERNEL_OK")
</pallas_src>

<mosaic_0001>
module attributes {stable_mosaic.version = 11 : i64} {
  func.func @_matmul_kernel(%arg0: i32, %arg1: i32, %arg2: memref<128x128xbf16, #tpu.memory_space<vmem>>, %arg3: memref<128x128xbf16, #tpu.memory_space<vmem>>, %arg4: memref<128x128xbf16, #tpu.memory_space<vmem>>, %arg5: memref<128x128xf32, #tpu.memory_space<vmem>>) attributes {dimension_semantics = [#tpu.dimension_semantics<parallel>, #tpu.dimension_semantics<arbitrary>], iteration_bounds = array<i64: 1, 1>, scalar_prefetch = 0 : i64, scratch_operands = 1 : i64, tpu.core_type = #tpu.core_type<tc>, window_params = [{transform_indices = @transform_0, window_bounds = array<i64: 128, 128>}, {transform_indices = @transform_1, window_bounds = array<i64: 128, 128>}, {transform_indices = @transform_2, window_bounds = array<i64: 128, 128>}]} {
    %c0_i32 = arith.constant 0 : i32
    %0 = arith.cmpi eq, %arg1, %c0_i32 : i32
    %1 = arith.extui %0 : i1 to i32
    %c0_i32_0 = arith.constant 0 : i32
    %2 = arith.cmpi ne, %1, %c0_i32_0 : i32
    scf.if %2 {
      %cst_10 = arith.constant 0.000000e+00 : f32
      %12 = vector.broadcast %cst_10 : f32 to vector<128x128xf32>
      %c0_11 = arith.constant 0 : index
      %c0_12 = arith.constant 0 : index
      %13 = vector.load %arg5[%c0_11, %c0_12] : memref<128x128xf32, #tpu.memory_space<vmem>>, vector<128x128xf32>
      tpu.vector_store %arg5[%c0_11, %c0_12], %12 {strides = array<i32>} : memref<128x128xf32, #tpu.memory_space<vmem>>, vector<128x128xf32>,
    } else {
    }
    %c0 = arith.constant 0 : index
    %c0_1 = arith.constant 0 : index
    %3 = vector.load %arg5[%c0, %c0_1] : memref<128x128xf32, #tpu.memory_space<vmem>>, vector<128x128xf32>
    %c0_2 = arith.constant 0 : index
    %c0_3 = arith.constant 0 : index
    %4 = vector.load %arg2[%c0_2, %c0_3] : memref<128x128xbf16, #tpu.memory_space<vmem>>, vector<128x128xbf16>
    %c0_4 = arith.constant 0 : index
    %c0_5 = arith.constant 0 : index
    %5 = vector.load %arg3[%c0_4, %c0_5] : memref<128x128xbf16, #tpu.memory_space<vmem>>, vector<128x128xbf16>
    %cst = arith.constant dense<0.000000e+00> : vector<128x128xf32>
    %6 = tpu.matmul %4, %5, %cst {dimension_numbers = #tpu.dot_dimension_numbers<[1], [0], [0], [1], [0, 0, 1, 1], [], []>} : vector<128x128xbf16>, vector<128x128xbf16>, vector<128x128xf32> -> vector<128x128xf32>
    %7 = arith.addf %3, %6 : vector<128x128xf32>
    %c0_6 = arith.constant 0 : index
    %c0_7 = arith.constant 0 : index
    %8 = vector.load %arg5[%c0_6, %c0_7] : memref<128x128xf32, #tpu.memory_space<vmem>>, vector<128x128xf32>
    tpu.vector_store %arg5[%c0_6, %c0_7], %7 {strides = array<i32>} : memref<128x128xf32, #tpu.memory_space<vmem>>, vector<128x128xf32>,
    %c0_i32_8 = arith.constant 0 : i32
    %9 = arith.cmpi eq, %arg1, %c0_i32_8 : i32
    %10 = arith.extui %9 : i1 to i32
    %c0_i32_9 = arith.constant 0 : i32
    %11 = arith.cmpi ne, %10, %c0_i32_9 : i32
    scf.if %11 {
      %c0_10 = arith.constant 0 : index
      %c0_11 = arith.constant 0 : index
      %12 = vector.load %arg5[%c0_10, %c0_11] : memref<128x128xf32, #tpu.memory_space<vmem>>, vector<128x128xf32>
      %13 = arith.truncf %12 : vector<128x128xf32> to vector<128x128xbf16>
      %c0_12 = arith.constant 0 : index
      %c0_13 = arith.constant 0 : index
      %14 = vector.load %arg4[%c0_12, %c0_13] : memref<128x128xbf16, #tpu.memory_space<vmem>>, vector<128x128xbf16>
      tpu.vector_store %arg4[%c0_12, %c0_13], %13 {strides = array<i32>} : memref<128x128xbf16, #tpu.memory_space<vmem>>, vector<128x128xbf16>,
    } else {
    }
    return
  }
  func.func @transform_0(%arg0: i32, %arg1: i32) -> (i32, i32) {
    %c0_i32 = arith.constant 0 : i32
    return %arg0, %arg1 : i32, i32
  }
  func.func @transform_1(%arg0: i32, %arg1: i32) -> (i32, i32) {
    %c0_i32 = arith.constant 0 : i32
    %c0_i32_0 = arith.constant 0 : i32
    return %arg1, %c0_i32 : i32, i32
  }
  func.func @transform_2(%arg0: i32, %arg1: i32) -> (i32, i32) {
    %c0_i32 = arith.constant 0 : i32
    %c0_i32_0 = arith.constant 0 : i32
    return %arg0, %c0_i32 : i32, i32
  }
}

module attributes {stable_mosaic.version = 11 : i64} {
  func.func @_gcn_layer_jk_kernel(%arg0: i32, %arg1: i32, %arg2: memref<128x128xbf16, #tpu.memory_space<vmem>>, %arg3: memref<128x128xbf16, #tpu.memory_space<vmem>>, %arg4: memref<1x128xf32, #tpu.memory_space<vmem>>, %arg5: memref<128x128xf32, #tpu.memory_space<vmem>>, %arg6: memref<128x128xbf16, #tpu.memory_space<vmem>>, %arg7: memref<128x128xf32, #tpu.memory_space<vmem>>, %arg8: memref<128x128xf32, #tpu.memory_space<vmem>>) attributes {dimension_semantics = [#tpu.dimension_semantics<parallel>, #tpu.dimension_semantics<arbitrary>], iteration_bounds = array<i64: 1, 1>, scalar_prefetch = 0 : i64, scratch_operands = 1 : i64, tpu.core_type = #tpu.core_type<tc>, window_params = [{transform_indices = @transform_0, window_bounds = array<i64: 128, 128>}, {transform_indices = @transform_1, window_bounds = array<i64: 128, 128>}, {pipeline_mode = #tpu.pipeline_mode<synchronous>, transform_indices = @transform_2, window_bounds = array<i64: 1, 128>}, {transform_indices = @transform_3, window_bounds = array<i64: 128, 128>}, {transform_indices = @transform_4, window_bounds = array<i64: 128, 128>}, {transform_indices = @transform_5, window_bounds = array<i64: 128, 128>}]} {
    %c0_i32 = arith.constant 0 : i32
    %0 = arith.cmpi eq, %arg1, %c0_i32 : i32
    %1 = arith.extui %0 : i1 to i32
    %c0_i32_0 = arith.constant 0 : i32
    %2 = arith.cmpi ne, %1, %c0_i32_0 : i32
    scf.if %2 {
      %cst_10 = arith.constant 0.000000e+00 : f32
      %12 = vector.broadcast %cst_10 : f32 to vector<128x128xf32>
      %c0_11 = arith.constant 0 : index
      %c0_12 = arith.constant 0 : index
      %13 = vector.load %arg8[%c0_11, %c0_12] : memref<128x128xf32, #tpu.memory_space<vmem>>, vector<128x128xf32>
      tpu.vector_store %arg8[%c0_11, %c0_12], %12 {strides = array<i32>} : memref<128x128xf32, #tpu.memory_space<vmem>>, vector<128x128xf32>,
    } else {
    }
    %c0 = arith.constant 0 : index
    %c0_1 = arith.constant 0 : index
    %3 = vector.load %arg8[%c0, %c0_1] : memref<128x128xf32, #tpu.memory_space<vmem>>, vector<128x128xf32>
    %c0_2 = arith.constant 0 : index
    %c0_3 = arith.constant 0 : index
    %4 = vector.load %arg2[%c0_2, %c0_3] : memref<128x128xbf16, #tpu.memory_space<vmem>>, vector<128x128xbf16>
    %c0_4 = arith.constant 0 : index
    %c0_5 = arith.constant 0 : index
    %5 = vector.load %arg3[%c0_4, %c0_5] : memref<128x128xbf16, #tpu.memory_space<vmem>>, vector<128x128xbf16>
    %cst = arith.constant dense<0.000000e+00> : vector<128x128xf32>
    %6 = tpu.matmul %4, %5, %cst {dimension_numbers = #tpu.dot_dimension_numbers<[1], [0], [0], [1], [0, 0, 1, 1], [], []>} : vector<128x128xbf16>, vector<128x128xbf16>, vector<128x128xf32> -> vector<128x128xf32>
    %7 = arith.addf %3, %6 : vector<128x128xf32>
    %c0_6 = arith.constant 0 : index
    %c0_7 = arith.constant 0 : index
    %8 = vector.load %arg8[%c0_6, %c0_7] : memref<128x128xf32, #tpu.memory_space<vmem>>, vector<128x128xf32>
    tpu.vector_store %arg8[%c0_6, %c0_7], %7 {strides = array<i32>} : memref<128x128xf32, #tpu.memory_space<vmem>>, vector<128x128xf32>,
    %c0_i32_8 = arith.constant 0 : i32
    %9 = arith.cmpi eq, %arg1, %c0_i32_8 : i32
    %10 = arith.extui %9 : i1 to i32
    %c0_i32_9 = arith.constant 0 : i32
    %11 = arith.cmpi ne, %10, %c0_i32_9 : i32
    scf.if %11 {
      %c0_10 = arith.constant 0 : index
      %c0_11 = arith.constant 0 : index
      %12 = vector.load %arg8[%c0_10, %c0_11] : memref<128x128xf32, #tpu.memory_space<vmem>>, vector<128x128xf32>
      %c0_12 = arith.constant 0 : index
      %c0_13 = arith.constant 0 : index
      %13 = vector.load %arg4[%c0_12, %c0_13] : memref<1x128xf32, #tpu.memory_space<vmem>>, vector<1x128xf32>
      %14 = vector.broadcast %13 : vector<1x128xf32> to vector<128x128xf32>
      %15 = arith.addf %12, %14 : vector<128x128xf32>
      %cst_14 = arith.constant 0.000000e+00 : f32
      %16 = vector.broadcast %cst_14 : f32 to vector<128x128xf32>
      %17 = arith.maximumf %15, %16 : vector<128x128xf32>
      %18 = arith.truncf %17 : vector<128x128xf32> to vector<128x128xbf16>
      %c0_15 = arith.constant 0 : index
      %c0_16 = arith.constant 0 : index
      %19 = vector.load %arg6[%c0_15, %c0_16] : memref<128x128xbf16, #tpu.memory_space<vmem>>, vector<128x128xbf16>
      tpu.vector_store %arg6[%c0_15, %c0_16], %18 {strides = array<i32>} : memref<128x128xbf16, #tpu.memory_space<vmem>>, vector<128x128xbf16>,
      %c0_17 = arith.constant 0 : index
      %c0_18 = arith.constant 0 : index
      %20 = vector.load %arg5[%c0_17, %c0_18] : memref<128x128xf32, #tpu.memory_space<vmem>>, vector<128x128xf32>
      %cst_19 = arith.constant 0.333333343 : f32
      %21 = vector.broadcast %cst_19 : f32 to vector<128x128xf32>
      %22 = arith.mulf %17, %21 : vector<128x128xf32>
      %23 = arith.addf %20, %22 : vector<128x128xf32>
      %c0_20 = arith.constant 0 : index
      %c0_21 = arith.constant 0 : index
      %24 = vector.load %arg7[%c0_20, %c0_21] : memref<128x128xf32, #tpu.memory_space<vmem>>, vector<128x128xf32>
      tpu.vector_store %arg7[%c0_20, %c0_21], %23 {strides = array<i32>} : memref<128x128xf32, #tpu.memory_space<vmem>>, vector<128x128xf32>,
    } else {
    }
    return
  }
  func.func @transform_0(%arg0: i32, %arg1: i32) -> (i32, i32) {
    %c0_i32 = arith.constant 0 : i32
    return %arg0, %arg1 : i32, i32
  }
  func.func @transform_1(%arg0: i32, %arg1: i32) -> (i32, i32) {
    %c0_i32 = arith.constant 0 : i32
    %c0_i32_0 = arith.constant 0 : i32
    return %arg1, %c0_i32 : i32, i32
  }
  func.func @transform_2(%arg0: i32, %arg1: i32) -> (i32, i32) {
    %c0_i32 = arith.constant 0 : i32
    %c0_i32_0 = arith.constant 0 : i32
    %c0_i32_1 = arith.constant 0 : i32
    return %c0_i32, %c0_i32_0 : i32, i32
  }
  func.func @transform_3(%arg0: i32, %arg1: i32) -> (i32, i32) {
    %c0_i32 = arith.constant 0 : i32
    %c0_i32_0 = arith.constant 0 : i32
    return %arg0, %c0_i32 : i32, i32
  }
  func.func @transform_4(%arg0: i32, %arg1: i32) -> (i32, i32) {
    %c0_i32 = arith.constant 0 : i32
    %c0_i32_0 = arith.constant 0 : i32
    return %arg0, %c0_i32 : i32, i32
  }
  func.func @transform_5(%arg0: i32, %arg1: i32) -> (i32, i32) {
    %c0_i32 = arith.constant 0 : i32
    %c0_i32_0 = arith.constant 0 : i32
    return %arg0, %c0_i32 : i32, i32
  }
}

module attributes {stable_mosaic.version = 11 : i64} {
  func.func @_gcn_layer_jk_kernel(%arg0: i32, %arg1: i32, %arg2: memref<128x128xbf16, #tpu.memory_space<vmem>>, %arg3: memref<128x128xbf16, #tpu.memory_space<vmem>>, %arg4: memref<1x128xf32, #tpu.memory_space<vmem>>, %arg5: memref<128x128xf32, #tpu.memory_space<vmem>>, %arg6: memref<128x128xbf16, #tpu.memory_space<vmem>>, %arg7: memref<128x128xf32, #tpu.memory_space<vmem>>, %arg8: memref<128x128xf32, #tpu.memory_space<vmem>>) attributes {dimension_semantics = [#tpu.dimension_semantics<parallel>, #tpu.dimension_semantics<arbitrary>], iteration_bounds = array<i64: 1, 1>, scalar_prefetch = 0 : i64, scratch_operands = 1 : i64, tpu.core_type = #tpu.core_type<tc>, window_params = [{transform_indices = @transform_0, window_bounds = array<i64: 128, 128>}, {transform_indices = @transform_1, window_bounds = array<i64: 128, 128>}, {pipeline_mode = #tpu.pipeline_mode<synchronous>, transform_indices = @transform_2, window_bounds = array<i64: 1, 128>}, {transform_indices = @transform_3, window_bounds = array<i64: 128, 128>}, {transform_indices = @transform_4, window_bounds = array<i64: 128, 128>}, {transform_indices = @transform_5, window_bounds = array<i64: 128, 128>}]} {
    %c0_i32 = arith.constant 0 : i32
    %0 = arith.cmpi eq, %arg1, %c0_i32 : i32
    %1 = arith.extui %0 : i1 to i32
    %c0_i32_0 = arith.constant 0 : i32
    %2 = arith.cmpi ne, %1, %c0_i32_0 : i32
    scf.if %2 {
      %cst_10 = arith.constant 0.000000e+00 : f32
      %12 = vector.broadcast %cst_10 : f32 to vector<128x128xf32>
      %c0_11 = arith.constant 0 : index
      %c0_12 = arith.constant 0 : index
      %13 = vector.load %arg8[%c0_11, %c0_12] : memref<128x128xf32, #tpu.memory_space<vmem>>, vector<128x128xf32>
      tpu.vector_store %arg8[%c0_11, %c0_12], %12 {strides = array<i32>} : memref<128x128xf32, #tpu.memory_space<vmem>>, vector<128x128xf32>,
    } else {
    }
    %c0 = arith.constant 0 : index
    %c0_1 = arith.constant 0 : index
    %3 = vector.load %arg8[%c0, %c0_1] : memref<128x128xf32, #tpu.memory_space<vmem>>, vector<128x128xf32>
    %c0_2 = arith.constant 0 : index
    %c0_3 = arith.constant 0 : index
    %4 = vector.load %arg2[%c0_2, %c0_3] : memref<128x128xbf16, #tpu.memory_space<vmem>>, vector<128x128xbf16>
    %c0_4 = arith.constant 0 : index
    %c0_5 = arith.constant 0 : index
    %5 = vector.load %arg3[%c0_4, %c0_5] : memref<128x128xbf16, #tpu.memory_space<vmem>>, vector<128x128xbf16>
    %cst = arith.constant dense<0.000000e+00> : vector<128x128xf32>
    %6 = tpu.matmul %4, %5, %cst {dimension_numbers = #tpu.dot_dimension_numbers<[1], [0], [0], [1], [0, 0, 1, 1], [], []>} : vector<128x128xbf16>, vector<128x128xbf16>, vector<128x128xf32> -> vector<128x128xf32>
    %7 = arith.addf %3, %6 : vector<128x128xf32>
    %c0_6 = arith.constant 0 : index
    %c0_7 = arith.constant 0 : index
    %8 = vector.load %arg8[%c0_6, %c0_7] : memref<128x128xf32, #tpu.memory_space<vmem>>, vector<128x128xf32>
    tpu.vector_store %arg8[%c0_6, %c0_7], %7 {strides = array<i32>} : memref<128x128xf32, #tpu.memory_space<vmem>>, vector<128x128xf32>,
    %c0_i32_8 = arith.constant 0 : i32
    %9 = arith.cmpi eq, %arg1, %c0_i32_8 : i32
    %10 = arith.extui %9 : i1 to i32
    %c0_i32_9 = arith.constant 0 : i32
    %11 = arith.cmpi ne, %10, %c0_i32_9 : i32
    scf.if %11 {
      %c0_10 = arith.constant 0 : index
      %c0_11 = arith.constant 0 : index
      %12 = vector.load %arg8[%c0_10, %c0_11] : memref<128x128xf32, #tpu.memory_space<vmem>>, vector<128x128xf32>
      %c0_12 = arith.constant 0 : index
      %c0_13 = arith.constant 0 : index
      %13 = vector.load %arg4[%c0_12, %c0_13] : memref<1x128xf32, #tpu.memory_space<vmem>>, vector<1x128xf32>
      %14 = vector.broadcast %13 : vector<1x128xf32> to vector<128x128xf32>
      %15 = arith.addf %12, %14 : vector<128x128xf32>
      %cst_14 = arith.constant 0.000000e+00 : f32
      %16 = vector.broadcast %cst_14 : f32 to vector<128x128xf32>
      %17 = arith.maximumf %15, %16 : vector<128x128xf32>
      %18 = arith.truncf %17 : vector<128x128xf32> to vector<128x128xbf16>
      %c0_15 = arith.constant 0 : index
      %c0_16 = arith.constant 0 : index
      %19 = vector.load %arg6[%c0_15, %c0_16] : memref<128x128xbf16, #tpu.memory_space<vmem>>, vector<128x128xbf16>
      tpu.vector_store %arg6[%c0_15, %c0_16], %18 {strides = array<i32>} : memref<128x128xbf16, #tpu.memory_space<vmem>>, vector<128x128xbf16>,
      %c0_17 = arith.constant 0 : index
      %c0_18 = arith.constant 0 : index
      %20 = vector.load %arg5[%c0_17, %c0_18] : memref<128x128xf32, #tpu.memory_space<vmem>>, vector<128x128xf32>
      %cst_19 = arith.constant 0.333333343 : f32
      %21 = vector.broadcast %cst_19 : f32 to vector<128x128xf32>
      %22 = arith.mulf %17, %21 : vector<128x128xf32>
      %23 = arith.addf %20, %22 : vector<128x128xf32>
      %c0_20 = arith.constant 0 : index
      %c0_21 = arith.constant 0 : index
      %24 = vector.load %arg7[%c0_20, %c0_21] : memref<128x128xf32, #tpu.memory_space<vmem>>, vector<128x128xf32>
      tpu.vector_store %arg7[%c0_20, %c0_21], %23 {strides = array<i32>} : memref<128x128xf32, #tpu.memory_space<vmem>>, vector<128x128xf32>,
    } else {
    }
    return
  }
  func.func @transform_0(%arg0: i32, %arg1: i32) -> (i32, i32) {
    %c0_i32 = arith.constant 0 : i32
    return %arg0, %arg1 : i32, i32
  }
  func.func @transform_1(%arg0: i32, %arg1: i32) -> (i32, i32) {
    %c0_i32 = arith.constant 0 : i32
    %c0_i32_0 = arith.constant 0 : i32
    return %arg1, %c0_i32 : i32, i32
  }
  func.func @transform_2(%arg0: i32, %arg1: i32) -> (i32, i32) {
    %c0_i32 = arith.constant 0 : i32
    %c0_i32_0 = arith.constant 0 : i32
    %c0_i32_1 = arith.constant 0 : i32
    return %c0_i32, %c0_i32_0 : i32, i32
  }
  func.func @transform_3(%arg0: i32, %arg1: i32) -> (i32, i32) {
    %c0_i32 = arith.constant 0 : i32
    %c0_i32_0 = arith.constant 0 : i32
    return %arg0, %c0_i32 : i32, i32
  }
  func.func @transform_4(%arg0: i32, %arg1: i32) -> (i32, i32) {
    %c0_i32 = arith.constant 0 : i32
    %c0_i32_0 = arith.constant 0 : i32
    return %arg0, %c0_i32 : i32, i32
  }
  func.func @transform_5(%arg0: i32, %arg1: i32) -> (i32, i32) {
    %c0_i32 = arith.constant 0 : i32
    %c0_i32_0 = arith.constant 0 : i32
    return %arg0, %c0_i32 : i32, i32
  }
}

module attributes {stable_mosaic.version = 11 : i64} {
  func.func @_matmul_kernel(%arg0: i32, %arg1: i32, %arg2: memref<128x128xf32, #tpu.memory_space<vmem>>, %arg3: memref<128x128xf32, #tpu.memory_space<vmem>>, %arg4: memref<1x128xf32, #tpu.memory_space<vmem>>, %arg5: memref<128x128xf32, #tpu.memory_space<vmem>>, %arg6: memref<128x128xf32, #tpu.memory_space<vmem>>) attributes {dimension_semantics = [#tpu.dimension_semantics<parallel>, #tpu.dimension_semantics<arbitrary>], iteration_bounds = array<i64: 1, 1>, scalar_prefetch = 0 : i64, scratch_operands = 1 : i64, tpu.core_type = #tpu.core_type<tc>, window_params = [{transform_indices = @transform_0, window_bounds = array<i64: 128, 128>}, {transform_indices = @transform_1, window_bounds = array<i64: 128, 128>}, {pipeline_mode = #tpu.pipeline_mode<synchronous>, transform_indices = @transform_2, window_bounds = array<i64: 1, 128>}, {transform_indices = @transform_3, window_bounds = array<i64: 128, 128>}]} {
    %c0_i32 = arith.constant 0 : i32
    %0 = arith.cmpi eq, %arg1, %c0_i32 : i32
    %1 = arith.extui %0 : i1 to i32
    %c0_i32_0 = arith.constant 0 : i32
    %2 = arith.cmpi ne, %1, %c0_i32_0 : i32
    scf.if %2 {
      %cst_10 = arith.constant 0.000000e+00 : f32
      %12 = vector.broadcast %cst_10 : f32 to vector<128x128xf32>
      %c0_11 = arith.constant 0 : index
      %c0_12 = arith.constant 0 : index
      %13 = vector.load %arg6[%c0_11, %c0_12] : memref<128x128xf32, #tpu.memory_space<vmem>>, vector<128x128xf32>
      tpu.vector_store %arg6[%c0_11, %c0_12], %12 {strides = array<i32>} : memref<128x128xf32, #tpu.memory_space<vmem>>, vector<128x128xf32>,
    } else {
    }
    %c0 = arith.constant 0 : index
    %c0_1 = arith.constant 0 : index
    %3 = vector.load %arg6[%c0, %c0_1] : memref<128x128xf32, #tpu.memory_space<vmem>>, vector<128x128xf32>
    %c0_2 = arith.constant 0 : index
    %c0_3 = arith.constant 0 : index
    %4 = vector.load %arg2[%c0_2, %c0_3] : memref<128x128xf32, #tpu.memory_space<vmem>>, vector<128x128xf32>
    %c0_4 = arith.constant 0 : index
    %c0_5 = arith.constant 0 : index
    %5 = vector.load %arg3[%c0_4, %c0_5] : memref<128x128xf32, #tpu.memory_space<vmem>>, vector<128x128xf32>
    %cst = arith.constant dense<0.000000e+00> : vector<128x128xf32>
    %6 = tpu.matmul %4, %5, %cst {dimension_numbers = #tpu.dot_dimension_numbers<[1], [0], [0], [1], [0, 0, 1, 1], [], []>} : vector<128x128xf32>, vector<128x128xf32>, vector<128x128xf32> -> vector<128x128xf32>
    %7 = arith.addf %3, %6 : vector<128x128xf32>
    %c0_6 = arith.constant 0 : index
    %c0_7 = arith.constant 0 : index
    %8 = vector.load %arg6[%c0_6, %c0_7] : memref<128x128xf32, #tpu.memory_space<vmem>>, vector<128x128xf32>
    tpu.vector_store %arg6[%c0_6, %c0_7], %7 {strides = array<i32>} : memref<128x128xf32, #tpu.memory_space<vmem>>, vector<128x128xf32>,
    %c0_i32_8 = arith.constant 0 : i32
    %9 = arith.cmpi eq, %arg1, %c0_i32_8 : i32
    %10 = arith.extui %9 : i1 to i32
    %c0_i32_9 = arith.constant 0 : i32
    %11 = arith.cmpi ne, %10, %c0_i32_9 : i32
    scf.if %11 {
      %c0_10 = arith.constant 0 : index
      %c0_11 = arith.constant 0 : index
      %12 = vector.load %arg6[%c0_10, %c0_11] : memref<128x128xf32, #tpu.memory_space<vmem>>, vector<128x128xf32>
      %c0_12 = arith.constant 0 : index
      %c0_13 = arith.constant 0 : index
      %13 = vector.load %arg4[%c0_12, %c0_13] : memref<1x128xf32, #tpu.memory_space<vmem>>, vector<1x128xf32>
      %14 = vector.broadcast %13 : vector<1x128xf32> to vector<128x128xf32>
      %15 = arith.addf %12, %14 : vector<128x128xf32>
      %c0_14 = arith.constant 0 : index
      %c0_15 = arith.constant 0 : index
      %16 = vector.load %arg5[%c0_14, %c0_15] : memref<128x128xf32, #tpu.memory_space<vmem>>, vector<128x128xf32>
      tpu.vector_store %arg5[%c0_14, %c0_15], %15 {strides = array<i32>} : memref<128x128xf32, #tpu.memory_space<vmem>>, vector<128x128xf32>,
    } else {
    }
    return
  }
  func.func @transform_0(%arg0: i32, %arg1: i32) -> (i32, i32) {
    %c0_i32 = arith.constant 0 : i32
    return %arg0, %arg1 : i32, i32
  }
  func.func @transform_1(%arg0: i32, %arg1: i32) -> (i32, i32) {
    %c0_i32 = arith.constant 0 : i32
    %c0_i32_0 = arith.constant 0 : i32
    return %arg1, %c0_i32 : i32, i32
  }
  func.func @transform_2(%arg0: i32, %arg1: i32) -> (i32, i32) {
    %c0_i32 = arith.constant 0 : i32
    %c0_i32_0 = arith.constant 0 : i32
    %c0_i32_1 = arith.constant 0 : i32
    return %c0_i32, %c0_i32_0 : i32, i32
  }
  func.func @transform_3(%arg0: i32, %arg1: i32) -> (i32, i32) {
    %c0_i32 = arith.constant 0 : i32
    %c0_i32_0 = arith.constant 0 : i32
    return %arg0, %c0_i32 : i32, i32
  }
}

</mosaic_0001>

<llo_original>
// kernel: gcn_with_jk_forward.7
$region0: #{gcn_with_jk_forward.7}
  #allocation0 [shape = 'u32[]', space=smem, size = 0x4, offset = 0x4, fixed_abs, tag = 'smem constant byte address 0x4 - core index']
  #allocation1 [shape = 'u32[144,128]{1,0:T(1,128)}', space=vmem, size = 0x12000, scoped, tag = 'internal scratch']
  #allocation2 [shape = 'f32[128,128]{1,0:T(8,128)}', space=vmem, size = 0x10000, scoped, tag = 'scratch operand']
  %s0 = inlined_call_operand.vmem [shape: bf16[128,128], index: 0, kind: input, shape index: {}]
  %s1 = inlined_call_operand.vmem [shape: bf16[128,128], index: 1, kind: input, shape index: {}]
  %s2 = inlined_call_operand.vmem [shape: bf16[128,128], index: 2, kind: output, shape index: {}]
  %s3 = sld [smem:[#allocation0]]
  $region26: #{gcn_with_jk_forward.7} parent=0
    _
  %s5 = ssub.s32 1, %s3
  %s6 = scalar_select 0, %s5, %s3
  // Predicated region
  $region2: #{gcn_with_jk_forward.7} parent=0 // pred_check
    _
  $region3: #{gcn_with_jk_forward.7} parent=0 // pred_check_branch
    %8 = sbr.rel (0) target = $region5
  $region4: #{gcn_with_jk_forward.7} parent=0 // pred_region
    _
  $region5: #{gcn_with_jk_forward.7} parent=0 // pred_fallthru
    _
  // Predicated region
  $region6: #{gcn_with_jk_forward.7} parent=0 // pred_check
    _
  $region7: #{gcn_with_jk_forward.7} parent=0 // pred_check_branch
    %10 = sbr.rel (0) target = $region9
  $region8: #{gcn_with_jk_forward.7} parent=0 // pred_region
    _
  $region9: #{gcn_with_jk_forward.7} parent=0 // pred_fallthru
    _
  %p12 = scmp.eq.s32.totalorder 0, 0
  // Predicated region
  $region10: #{gcn_with_jk_forward.7} parent=0 // pred_check
    %p13 = pneg %p12
  $region11: #{gcn_with_jk_forward.7} parent=0 // pred_check_branch
    %15 = sbr.rel (%p13) target = $region13
  $region12: #{gcn_with_jk_forward.7} parent=0 // pred_region
    %16 = vst [vmem:[#allocation2] sm:$0xff] 0.0
    %17 = vst [vmem:[#allocation2 + $0x8] sm:$0xff] 0.0
    %18 = vst [vmem:[#allocation2 + $0x10] sm:$0xff] 0.0
    %19 = vst [vmem:[#allocation2 + $0x18] sm:$0xff] 0.0
    %20 = vst [vmem:[#allocation2 + $0x20] sm:$0xff] 0.0
    %21 = vst [vmem:[#allocation2 + $0x28] sm:$0xff] 0.0
    %22 = vst [vmem:[#allocation2 + $0x30] sm:$0xff] 0.0
    %23 = vst [vmem:[#allocation2 + $0x38] sm:$0xff] 0.0
    %24 = vst [vmem:[#allocation2 + $0x40] sm:$0xff] 0.0
    %25 = vst [vmem:[#allocation2 + $0x48] sm:$0xff] 0.0
    %26 = vst [vmem:[#allocation2 + $0x50] sm:$0xff] 0.0
    %27 = vst [vmem:[#allocation2 + $0x58] sm:$0xff] 0.0
    %28 = vst [vmem:[#allocation2 + $0x60] sm:$0xff] 0.0
    %29 = vst [vmem:[#allocation2 + $0x68] sm:$0xff] 0.0
    %30 = vst [vmem:[#allocation2 + $0x70] sm:$0xff] 0.0
    %31 = vst [vmem:[#allocation2 + $0x78] sm:$0xff] 0.0
  $region13: #{gcn_with_jk_forward.7} parent=0 // pred_fallthru
    _
  %v32 = vld [vmem:[#allocation2] sm:$0xff]
  %v33 = vld [vmem:[#allocation2 + $0x8] sm:$0xff]
  %v34 = vld [vmem:[#allocation2 + $0x10] sm:$0xff]
  %v35 = vld [vmem:[#allocation2 + $0x18] sm:$0xff]
  %v36 = vld [vmem:[#allocation2 + $0x20] sm:$0xff]
  %v37 = vld [vmem:[#allocation2 + $0x28] sm:$0xff]
  %v38 = vld [vmem:[#allocation2 + $0x30] sm:$0xff]
  %v39 = vld [vmem:[#allocation2 + $0x38] sm:$0xff]
  %v40 = vld [vmem:[#allocation2 + $0x40] sm:$0xff]
  %v41 = vld [vmem:[#allocation2 + $0x48] sm:$0xff]
  %v42 = vld [vmem:[#allocation2 + $0x50] sm:$0xff]
  %v43 = vld [vmem:[#allocation2 + $0x58] sm:$0xff]
  %v44 = vld [vmem:[#allocation2 + $0x60] sm:$0xff]
  %v45 = vld [vmem:[#allocation2 + $0x68] sm:$0xff]
  %v46 = vld [vmem:[#allocation2 + $0x70] sm:$0xff]
  %v47 = vld [vmem:[#allocation2 + $0x78] sm:$0xff]
  %v48 = vld [vmem:[%s0] sm:$0xf]
  %v49 = vld [vmem:[%s0 + $0x4] sm:$0xf]
  %v50 = vld [vmem:[%s0 + $0x8] sm:$0xf]
  %v51 = vld [vmem:[%s0 + $0xc] sm:$0xf]
  %v52 = vld [vmem:[%s0 + $0x10] sm:$0xf]
  %v53 = vld [vmem:[%s0 + $0x14] sm:$0xf]
  %v54 = vld [vmem:[%s0 + $0x18] sm:$0xf]
  %v55 = vld [vmem:[%s0 + $0x1c] sm:$0xf]
  %v56 = vld [vmem:[%s0 + $0x20] sm:$0xf]
  %v57 = vld [vmem:[%s0 + $0x24] sm:$0xf]
  %v58 = vld [vmem:[%s0 + $0x28] sm:$0xf]
  %v59 = vld [vmem:[%s0 + $0x2c] sm:$0xf]
  %v60 = vld [vmem:[%s0 + $0x30] sm:$0xf]
  %v61 = vld [vmem:[%s0 + $0x34] sm:$0xf]
  %v62 = vld [vmem:[%s0 + $0x38] sm:$0xf]
  %v63 = vld [vmem:[%s0 + $0x3c] sm:$0xf]
  %v64 = vld [vmem:[%s1] sm:$0xf]
  %v65 = vld [vmem:[%s1 + $0x4] sm:$0xf]
  %v66 = vld [vmem:[%s1 + $0x8] sm:$0xf]
  %v67 = vld [vmem:[%s1 + $0xc] sm:$0xf]
  %v68 = vld [vmem:[%s1 + $0x10] sm:$0xf]
  %v69 = vld [vmem:[%s1 + $0x14] sm:$0xf]
  %v70 = vld [vmem:[%s1 + $0x18] sm:$0xf]
  %v71 = vld [vmem:[%s1 + $0x1c] sm:$0xf]
  %v72 = vld [vmem:[%s1 + $0x20] sm:$0xf]
  %v73 = vld [vmem:[%s1 + $0x24] sm:$0xf]
  %v74 = vld [vmem:[%s1 + $0x28] sm:$0xf]
  %v75 = vld [vmem:[%s1 + $0x2c] sm:$0xf]
  %v76 = vld [vmem:[%s1 + $0x30] sm:$0xf]
  %v77 = vld [vmem:[%s1 + $0x34] sm:$0xf]
  %v78 = vld [vmem:[%s1 + $0x38] sm:$0xf]
  %v79 = vld [vmem:[%s1 + $0x3c] sm:$0xf]
  %v96 = vunpack.c.l.b16 %v48
  %v97 = vunpack.c.l.b16 %v49
  %v98 = vunpack.c.l.b16 %v50
  %v99 = vunpack.c.l.b16 %v51
  %v100 = vunpack.c.l.b16 %v52
  %v101 = vunpack.c.l.b16 %v53
  %v102 = vunpack.c.l.b16 %v54
  %v103 = vunpack.c.l.b16 %v55
  %v104 = vunpack.c.l.b16 %v56
  %v105 = vunpack.c.l.b16 %v57
  %v106 = vunpack.c.l.b16 %v58
  %v107 = vunpack.c.l.b16 %v59
  %v108 = vunpack.c.l.b16 %v60
  %v109 = vunpack.c.l.b16 %v61
  %v110 = vunpack.c.l.b16 %v62
  %v111 = vunpack.c.l.b16 %v63
  %v112 = vpack.c.b16 %v97, %v96
  %v113 = vpack.c.b16 %v99, %v98
  %v114 = vpack.c.b16 %v101, %v100
  %v115 = vpack.c.b16 %v103, %v102
  %v116 = vpack.c.b16 %v105, %v104
  %v117 = vpack.c.b16 %v107, %v106
  %v118 = vpack.c.b16 %v109, %v108
  %v119 = vpack.c.b16 %v111, %v110
  %v144 = vunpack.c.l.b16 %v64
  %v145 = vunpack.c.l.b16 %v65
  %v146 = vunpack.c.l.b16 %v66
  %v147 = vunpack.c.l.b16 %v67
  %v148 = vunpack.c.l.b16 %v68
  %v149 = vunpack.c.l.b16 %v69
  %v150 = vunpack.c.l.b16 %v70
  %v151 = vunpack.c.l.b16 %v71
  %v152 = vunpack.c.l.b16 %v72
  %v153 = vunpack.c.l.b16 %v73
  %v154 = vunpack.c.l.b16 %v74
  %v155 = vunpack.c.l.b16 %v75
  %v156 = vunpack.c.l.b16 %v76
  %v157 = vunpack.c.l.b16 %v77
  %v158 = vunpack.c.l.b16 %v78
  %v159 = vunpack.c.l.b16 %v79
  %v160 = vpack.c.b16 %v145, %v144
  %v161 = vpack.c.b16 %v147, %v146
  %v162 = vpack.c.b16 %v149, %v148
  %v163 = vpack.c.b16 %v151, %v150
  %v164 = vpack.c.b16 %v153, %v152
  %v165 = vpack.c.b16 %v155, %v154
  %v166 = vpack.c.b16 %v157, %v156
  %v167 = vpack.c.b16 %v159, %v158
  %176 = vmatprep.subr.bf16.mxu0 0
  %177 = vmatpush1.bf16.msra.mxu0 %v167
  %178 = vmatprep.subr.bf16.mxu0 0
  %179 = vmatpush1.bf16.msra.mxu0 %v166
  %180 = vmatprep.subr.bf16.mxu0 0
  %181 = vmatpush1.bf16.msra.mxu0 %v165
  %182 = vmatprep.subr.bf16.mxu0 0
  %183 = vmatpush1.bf16.msra.mxu0 %v164
  %184 = vmatprep.subr.bf16.mxu0 0
  %185 = vmatpush1.bf16.msra.mxu0 %v163
  %186 = vmatprep.subr.bf16.mxu0 0
  %187 = vmatpush1.bf16.msra.mxu0 %v162
  %188 = vmatprep.subr.bf16.mxu0 0
  %189 = vmatpush1.bf16.msra.mxu0 %v161
  %190 = vmatprep.subr.bf16.mxu0 0
  %191 = vmatpush1.bf16.msra.mxu0 %v160
  %192 = vmatprep.subr.bf16.mxu0 0
  %193 = vmatpush2.bf16.msra.mxu0 0
  %194 = vmatprep.subr.bf16.mxu0 0
  %195 = vmatpush2.bf16.msra.mxu0 0
  %196 = vmatprep.subr.bf16.mxu0 0
  %197 = vmatpush2.bf16.msra.mxu0 0
  %198 = vmatprep.subr.bf16.mxu0 0
  %199 = vmatpush2.bf16.msra.mxu0 0
  %200 = vmatprep.subr.bf16.mxu0 0
  %201 = vmatpush2.bf16.msra.mxu0 0
  %202 = vmatprep.subr.bf16.mxu0 0
  %203 = vmatpush2.bf16.msra.mxu0 0
  %204 = vmatprep.subr.bf16.mxu0 0
  %205 = vmatpush2.bf16.msra.mxu0 0
  %206 = vmatprep.subr.bf16.mxu0 0
  %207 = vmatpush2.bf16.msra.mxu0 0
  %208 = vmatprep.mubr.bf16.mxu0 0
  %209 = vmatmul.mubr.bf16.gmra.mxu0 %v112
  %v210 = vpop.f32.mrf.mxu0
  %v211 = vadd.f32 0.0, %v210
  %v212 = vpop.f32.mrf.mxu0
  %v213 = vpop.f32.mrf.mxu0
  %v214 = vadd.f32 0.0, %v213
  %v215 = vpop.f32.mrf.mxu0
  %216 = vmatprep.mubr.bf16.mxu0 0
  %217 = vmatmul.mubr.bf16.gmra.mxu0 %v113
  %v218 = vpop.f32.mrf.mxu0
  %v219 = vadd.f32 0.0, %v218
  %v220 = vpop.f32.mrf.mxu0
  %v221 = vpop.f32.mrf.mxu0
  %v222 = vadd.f32 0.0, %v221
  %v223 = vpop.f32.mrf.mxu0
  %224 = vmatprep.mubr.bf16.mxu0 0
  %225 = vmatmul.mubr.bf16.gmra.mxu0 %v114
  %v226 = vpop.f32.mrf.mxu0
  %v227 = vadd.f32 0.0, %v226
  %v228 = vpop.f32.mrf.mxu0
  %v229 = vpop.f32.mrf.mxu0
  %v230 = vadd.f32 0.0, %v229
  %v231 = vpop.f32.mrf.mxu0
  %232 = vmatprep.mubr.bf16.mxu0 0
  %233 = vmatmul.mubr.bf16.gmra.mxu0 %v115
  %v234 = vpop.f32.mrf.mxu0
  %v235 = vadd.f32 0.0, %v234
  %v236 = vpop.f32.mrf.mxu0
  %v237 = vpop.f32.mrf.mxu0
  %v238 = vadd.f32 0.0, %v237
  %v239 = vpop.f32.mrf.mxu0
  %240 = vmatprep.mubr.bf16.mxu0 0
  %241 = vmatmul.mubr.bf16.gmra.mxu0 %v116
  %v242 = vpop.f32.mrf.mxu0
  %v243 = vadd.f32 0.0, %v242
  %v244 = vpop.f32.mrf.mxu0
  %v245 = vpop.f32.mrf.mxu0
  %v246 = vadd.f32 0.0, %v245
  %v247 = vpop.f32.mrf.mxu0
  %248 = vmatprep.mubr.bf16.mxu0 0
  %249 = vmatmul.mubr.bf16.gmra.mxu0 %v117
  %v250 = vpop.f32.mrf.mxu0
  %v251 = vadd.f32 0.0, %v250
  %v252 = vpop.f32.mrf.mxu0
  %v253 = vpop.f32.mrf.mxu0
  %v254 = vadd.f32 0.0, %v253
  %v255 = vpop.f32.mrf.mxu0
  %256 = vmatprep.mubr.bf16.mxu0 0
  %257 = vmatmul.mubr.bf16.gmra.mxu0 %v118
  %v258 = vpop.f32.mrf.mxu0
  %v259 = vadd.f32 0.0, %v258
  %v260 = vpop.f32.mrf.mxu0
  %v261 = vpop.f32.mrf.mxu0
  %v262 = vadd.f32 0.0, %v261
  %v263 = vpop.f32.mrf.mxu0
  %264 = vmatprep.mubr.bf16.mxu0 0
  %265 = vmatmul.mubr.bf16.gmra.mxu0 %v119
  %v266 = vpop.f32.mrf.mxu0
  %v267 = vadd.f32 0.0, %v266
  %v268 = vpop.f32.mrf.mxu0
  %v269 = vpop.f32.mrf.mxu0
  %v270 = vadd.f32 0.0, %v269
  %v271 = vpop.f32.mrf.mxu0
  %272 = vdwg.mxu0
  %v273 = vadd.f32 %v32, %v211
  %v274 = vadd.f32 %v33, %v214
  %v275 = vadd.f32 %v34, %v219
  %v276 = vadd.f32 %v35, %v222
  %v277 = vadd.f32 %v36, %v227
  %v278 = vadd.f32 %v37, %v230
  %v279 = vadd.f32 %v38, %v235
  %v280 = vadd.f32 %v39, %v238
  %v281 = vadd.f32 %v40, %v243
  %v282 = vadd.f32 %v41, %v246
  %v283 = vadd.f32 %v42, %v251
  %v284 = vadd.f32 %v43, %v254
  %v285 = vadd.f32 %v44, %v259
  %v286 = vadd.f32 %v45, %v262
  %v287 = vadd.f32 %v46, %v267
  %v288 = vadd.f32 %v47, %v270
  %289 = vst [vmem:[#allocation2] sm:$0xff] %v273
  %290 = vst [vmem:[#allocation2 + $0x8] sm:$0xff] %v274
  %291 = vst [vmem:[#allocation2 + $0x10] sm:$0xff] %v275
  %292 = vst [vmem:[#allocation2 + $0x18] sm:$0xff] %v276
  %293 = vst [vmem:[#allocation2 + $0x20] sm:$0xff] %v277
  %294 = vst [vmem:[#allocation2 + $0x28] sm:$0xff] %v278
  %295 = vst [vmem:[#allocation2 + $0x30] sm:$0xff] %v279
  %296 = vst [vmem:[#allocation2 + $0x38] sm:$0xff] %v280
  %297 = vst [vmem:[#allocation2 + $0x40] sm:$0xff] %v281
  %298 = vst [vmem:[#allocation2 + $0x48] sm:$0xff] %v282
  %299 = vst [vmem:[#allocation2 + $0x50] sm:$0xff] %v283
  %300 = vst [vmem:[#allocation2 + $0x58] sm:$0xff] %v284
  %301 = vst [vmem:[#allocation2 + $0x60] sm:$0xff] %v285
  %302 = vst [vmem:[#allocation2 + $0x68] sm:$0xff] %v286
  %303 = vst [vmem:[#allocation2 + $0x70] sm:$0xff] %v287
  %304 = vst [vmem:[#allocation2 + $0x78] sm:$0xff] %v288
  // Predicated region
  $region14: #{gcn_with_jk_forward.7} parent=0 // pred_check
    %p305 = pneg %p12
  $region15: #{gcn_with_jk_forward.7} parent=0 // pred_check_branch
    %307 = sbr.rel (%p305) target = $region17
  $region16: #{gcn_with_jk_forward.7} parent=0 // pred_region
    %v308 = vld [vmem:[#allocation2] sm:$0xff]
    %v309 = vld [vmem:[#allocation2 + $0x8] sm:$0xff]
    %v310 = vld [vmem:[#allocation2 + $0x10] sm:$0xff]
    %v311 = vld [vmem:[#allocation2 + $0x18] sm:$0xff]
    %v312 = vld [vmem:[#allocation2 + $0x20] sm:$0xff]
    %v313 = vld [vmem:[#allocation2 + $0x28] sm:$0xff]
    %v314 = vld [vmem:[#allocation2 + $0x30] sm:$0xff]
    %v315 = vld [vmem:[#allocation2 + $0x38] sm:$0xff]
    %v316 = vld [vmem:[#allocation2 + $0x40] sm:$0xff]
    %v317 = vld [vmem:[#allocation2 + $0x48] sm:$0xff]
    %v318 = vld [vmem:[#allocation2 + $0x50] sm:$0xff]
    %v319 = vld [vmem:[#allocation2 + $0x58] sm:$0xff]
    %v320 = vld [vmem:[#allocation2 + $0x60] sm:$0xff]
    %v321 = vld [vmem:[#allocation2 + $0x68] sm:$0xff]
    %v322 = vld [vmem:[#allocation2 + $0x70] sm:$0xff]
    %v323 = vld [vmem:[#allocation2 + $0x78] sm:$0xff]
    %v324 = vpack.c.bf16 %v309, %v308
    %v325 = vpack.c.bf16 %v311, %v310
    %v326 = vpack.c.bf16 %v313, %v312
    %v327 = vpack.c.bf16 %v315, %v314
    %v328 = vpack.c.bf16 %v317, %v316
    %v329 = vpack.c.bf16 %v319, %v318
    %v330 = vpack.c.bf16 %v321, %v320
    %v331 = vpack.c.bf16 %v323, %v322
    %v340 = vunpack.c.l.b16 %v324
    %v341 = vunpack.c.h.b16 %v324
    %v342 = vunpack.c.l.b16 %v325
    %v343 = vunpack.c.h.b16 %v325
    %v344 = vunpack.c.l.b16 %v326
    %v345 = vunpack.c.h.b16 %v326
    %v346 = vunpack.c.l.b16 %v327
    %v347 = vunpack.c.h.b16 %v327
    %v348 = vunpack.c.l.b16 %v328
    %v349 = vunpack.c.h.b16 %v328
    %v350 = vunpack.c.l.b16 %v329
    %v351 = vunpack.c.h.b16 %v329
    %v352 = vunpack.c.l.b16 %v330
    %v353 = vunpack.c.h.b16 %v330
    %v354 = vunpack.c.l.b16 %v331
    %v355 = vunpack.c.h.b16 %v331
    %v356 = vpack.c.b16 %v340, %v340
    %v357 = vpack.c.b16 %v341, %v341
    %v358 = vpack.c.b16 %v342, %v342
    %v359 = vpack.c.b16 %v343, %v343
    %v360 = vpack.c.b16 %v344, %v344
    %v361 = vpack.c.b16 %v345, %v345
    %v362 = vpack.c.b16 %v346, %v346
    %v363 = vpack.c.b16 %v347, %v347
    %v364 = vpack.c.b16 %v348, %v348
    %v365 = vpack.c.b16 %v349, %v349
    %v366 = vpack.c.b16 %v350, %v350
    %v367 = vpack.c.b16 %v351, %v351
    %v368 = vpack.c.b16 %v352, %v352
    %v369 = vpack.c.b16 %v353, %v353
    %v370 = vpack.c.b16 %v354, %v354
    %v371 = vpack.c.b16 %v355, %v355
    %388 = vst [vmem:[%s2] sm:$0xf] %v356
    %389 = vst [vmem:[%s2 + $0x4] sm:$0xf] %v357
    %390 = vst [vmem:[%s2 + $0x8] sm:$0xf] %v358
    %391 = vst [vmem:[%s2 + $0xc] sm:$0xf] %v359
    %392 = vst [vmem:[%s2 + $0x10] sm:$0xf] %v360
    %393 = vst [vmem:[%s2 + $0x14] sm:$0xf] %v361
    %394 = vst [vmem:[%s2 + $0x18] sm:$0xf] %v362
    %395 = vst [vmem:[%s2 + $0x1c] sm:$0xf] %v363
    %396 = vst [vmem:[%s2 + $0x20] sm:$0xf] %v364
    %397 = vst [vmem:[%s2 + $0x24] sm:$0xf] %v365
    %398 = vst [vmem:[%s2 + $0x28] sm:$0xf] %v366
    %399 = vst [vmem:[%s2 + $0x2c] sm:$0xf] %v367
    %400 = vst [vmem:[%s2 + $0x30] sm:$0xf] %v368
    %401 = vst [vmem:[%s2 + $0x34] sm:$0xf] %v369
    %402 = vst [vmem:[%s2 + $0x38] sm:$0xf] %v370
    %403 = vst [vmem:[%s2 + $0x3c] sm:$0xf] %v371
  $region17: #{gcn_with_jk_forward.7} parent=0 // pred_fallthru
    _
  // Predicated region
  $region18: #{gcn_with_jk_forward.7} parent=0 // pred_check
    _
  $region19: #{gcn_with_jk_forward.7} parent=0 // pred_check_branch
    %405 = sbr.rel (0) target = $region21
  $region20: #{gcn_with_jk_forward.7} parent=0 // pred_region
    _
  $region21: #{gcn_with_jk_forward.7} parent=0 // pred_fallthru
    _
  // Predicated region
  $region22: #{gcn_with_jk_forward.7} parent=0 // pred_check
    _
  $region23: #{gcn_with_jk_forward.7} parent=0 // pred_check_branch
    %407 = sbr.rel (0) target = $region25
  $region24: #{gcn_with_jk_forward.7} parent=0 // pred_region
    _
  $region25: #{gcn_with_jk_forward.7} parent=0 // pred_fallthru
    _

// kernel: gcn_with_jk_forward.8
$region0: #{gcn_with_jk_forward.8}
  #allocation0 [shape = 'u32[]', space=smem, size = 0x4, offset = 0x4, fixed_abs, tag = 'smem constant byte address 0x4 - core index']
  #allocation1 [shape = 'u32[144,128]{1,0:T(1,128)}', space=vmem, size = 0x12000, scoped, tag = 'internal scratch']
  #allocation2 [shape = 'f32[128,128]{1,0:T(8,128)}', space=vmem, size = 0x10000, scoped, tag = 'scratch operand']
  %s0 = inlined_call_operand.vmem [shape: bf16[128,128], index: 0, kind: input, shape index: {}]
  %s1 = inlined_call_operand.vmem [shape: bf16[128,128], index: 1, kind: input, shape index: {}]
  %s2 = inlined_call_operand.vmem [shape: f32[1,128], index: 2, kind: input, shape index: {}]
  %s3 = inlined_call_operand.vmem [shape: f32[128,128], index: 3, kind: input, shape index: {}, may-alias: {3,5}]
  %s4 = inlined_call_operand.vmem [shape: bf16[128,128], index: 4, kind: output, shape index: {0}]
  %s5 = inlined_call_operand.vmem [shape: f32[128,128], index: 5, kind: output, shape index: {1}, may-alias: {3,5}]
  %6 = xla_tuple %s4, %s5
  %s7 = sld [smem:[#allocation0]]
  $region42: #{gcn_with_jk_forward.8} parent=0
    _
  %s9 = ssub.s32 1, %s7
  %s10 = scalar_select 0, %s9, %s7
  // Predicated region
  $region2: #{gcn_with_jk_forward.8} parent=0 // pred_check
    _
  $region3: #{gcn_with_jk_forward.8} parent=0 // pred_check_branch
    %12 = sbr.rel (0) target = $region5
  $region4: #{gcn_with_jk_forward.8} parent=0 // pred_region
    _
  $region5: #{gcn_with_jk_forward.8} parent=0 // pred_fallthru
    _
  // Predicated region
  $region6: #{gcn_with_jk_forward.8} parent=0 // pred_check
    _
  $region7: #{gcn_with_jk_forward.8} parent=0 // pred_check_branch
    %14 = sbr.rel (0) target = $region9
  $region8: #{gcn_with_jk_forward.8} parent=0 // pred_region
    _
  $region9: #{gcn_with_jk_forward.8} parent=0 // pred_fallthru
    _
  // Predicated region
  $region10: #{gcn_with_jk_forward.8} parent=0 // pred_check
    _
  $region11: #{gcn_with_jk_forward.8} parent=0 // pred_check_branch
    %16 = sbr.rel (0) target = $region13
  $region12: #{gcn_with_jk_forward.8} parent=0 // pred_region
    _
  $region13: #{gcn_with_jk_forward.8} parent=0 // pred_fallthru
    _
  // Predicated region
  $region14: #{gcn_with_jk_forward.8} parent=0 // pred_check
    _
  $region15: #{gcn_with_jk_forward.8} parent=0 // pred_check_branch
    %18 = sbr.rel (0) target = $region17
  $region16: #{gcn_with_jk_forward.8} parent=0 // pred_region
    _
  $region17: #{gcn_with_jk_forward.8} parent=0 // pred_fallthru
    _
  %p20 = scmp.eq.s32.totalorder 0, 0
  // Predicated region
  $region18: #{gcn_with_jk_forward.8} parent=0 // pred_check
    %p21 = pneg %p20
  $region19: #{gcn_with_jk_forward.8} parent=0 // pred_check_branch
    %23 = sbr.rel (%p21) target = $region21
  $region20: #{gcn_with_jk_forward.8} parent=0 // pred_region
    %24 = vst [vmem:[#allocation2] sm:$0xff] 0.0
    %25 = vst [vmem:[#allocation2 + $0x8] sm:$0xff] 0.0
    %26 = vst [vmem:[#allocation2 + $0x10] sm:$0xff] 0.0
    %27 = vst [vmem:[#allocation2 + $0x18] sm:$0xff] 0.0
    %28 = vst [vmem:[#allocation2 + $0x20] sm:$0xff] 0.0
    %29 = vst [vmem:[#allocation2 + $0x28] sm:$0xff] 0.0
    %30 = vst [vmem:[#allocation2 + $0x30] sm:$0xff] 0.0
    %31 = vst [vmem:[#allocation2 + $0x38] sm:$0xff] 0.0
    %32 = vst [vmem:[#allocation2 + $0x40] sm:$0xff] 0.0
    %33 = vst [vmem:[#allocation2 + $0x48] sm:$0xff] 0.0
    %34 = vst [vmem:[#allocation2 + $0x50] sm:$0xff] 0.0
    %35 = vst [vmem:[#allocation2 + $0x58] sm:$0xff] 0.0
    %36 = vst [vmem:[#allocation2 + $0x60] sm:$0xff] 0.0
    %37 = vst [vmem:[#allocation2 + $0x68] sm:$0xff] 0.0
    %38 = vst [vmem:[#allocation2 + $0x70] sm:$0xff] 0.0
    %39 = vst [vmem:[#allocation2 + $0x78] sm:$0xff] 0.0
  $region21: #{gcn_with_jk_forward.8} parent=0 // pred_fallthru
    _
  %v40 = vld [vmem:[#allocation2] sm:$0xff]
  %v41 = vld [vmem:[#allocation2 + $0x8] sm:$0xff]
  %v42 = vld [vmem:[#allocation2 + $0x10] sm:$0xff]
  %v43 = vld [vmem:[#allocation2 + $0x18] sm:$0xff]
  %v44 = vld [vmem:[#allocation2 + $0x20] sm:$0xff]
  %v45 = vld [vmem:[#allocation2 + $0x28] sm:$0xff]
  %v46 = vld [vmem:[#allocation2 + $0x30] sm:$0xff]
  %v47 = vld [vmem:[#allocation2 + $0x38] sm:$0xff]
  %v48 = vld [vmem:[#allocation2 + $0x40] sm:$0xff]
  %v49 = vld [vmem:[#allocation2 + $0x48] sm:$0xff]
  %v50 = vld [vmem:[#allocation2 + $0x50] sm:$0xff]
  %v51 = vld [vmem:[#allocation2 + $0x58] sm:$0xff]
  %v52 = vld [vmem:[#allocation2 + $0x60] sm:$0xff]
  %v53 = vld [vmem:[#allocation2 + $0x68] sm:$0xff]
  %v54 = vld [vmem:[#allocation2 + $0x70] sm:$0xff]
  %v55 = vld [vmem:[#allocation2 + $0x78] sm:$0xff]
  %v56 = vld [vmem:[%s0] sm:$0xf]
  %v57 = vld [vmem:[%s0 + $0x4] sm:$0xf]
  %v58 = vld [vmem:[%s0 + $0x8] sm:$0xf]
  %v59 = vld [vmem:[%s0 + $0xc] sm:$0xf]
  %v60 = vld [vmem:[%s0 + $0x10] sm:$0xf]
  %v61 = vld [vmem:[%s0 + $0x14] sm:$0xf]
  %v62 = vld [vmem:[%s0 + $0x18] sm:$0xf]
  %v63 = vld [vmem:[%s0 + $0x1c] sm:$0xf]
  %v64 = vld [vmem:[%s0 + $0x20] sm:$0xf]
  %v65 = vld [vmem:[%s0 + $0x24] sm:$0xf]
  %v66 = vld [vmem:[%s0 + $0x28] sm:$0xf]
  %v67 = vld [vmem:[%s0 + $0x2c] sm:$0xf]
  %v68 = vld [vmem:[%s0 + $0x30] sm:$0xf]
  %v69 = vld [vmem:[%s0 + $0x34] sm:$0xf]
  %v70 = vld [vmem:[%s0 + $0x38] sm:$0xf]
  %v71 = vld [vmem:[%s0 + $0x3c] sm:$0xf]
  %v72 = vld [vmem:[%s1] sm:$0xf]
  %v73 = vld [vmem:[%s1 + $0x4] sm:$0xf]
  %v74 = vld [vmem:[%s1 + $0x8] sm:$0xf]
  %v75 = vld [vmem:[%s1 + $0xc] sm:$0xf]
  %v76 = vld [vmem:[%s1 + $0x10] sm:$0xf]
  %v77 = vld [vmem:[%s1 + $0x14] sm:$0xf]
  %v78 = vld [vmem:[%s1 + $0x18] sm:$0xf]
  %v79 = vld [vmem:[%s1 + $0x1c] sm:$0xf]
  %v80 = vld [vmem:[%s1 + $0x20] sm:$0xf]
  %v81 = vld [vmem:[%s1 + $0x24] sm:$0xf]
  %v82 = vld [vmem:[%s1 + $0x28] sm:$0xf]
  %v83 = vld [vmem:[%s1 + $0x2c] sm:$0xf]
  %v84 = vld [vmem:[%s1 + $0x30] sm:$0xf]
  %v85 = vld [vmem:[%s1 + $0x34] sm:$0xf]
  %v86 = vld [vmem:[%s1 + $0x38] sm:$0xf]
  %v87 = vld [vmem:[%s1 + $0x3c] sm:$0xf]
  %v104 = vunpack.c.l.b16 %v56
  %v105 = vunpack.c.l.b16 %v57
  %v106 = vunpack.c.l.b16 %v58
  %v107 = vunpack.c.l.b16 %v59
  %v108 = vunpack.c.l.b16 %v60
  %v109 = vunpack.c.l.b16 %v61
  %v110 = vunpack.c.l.b16 %v62
  %v111 = vunpack.c.l.b16 %v63
  %v112 = vunpack.c.l.b16 %v64
  %v113 = vunpack.c.l.b16 %v65
  %v114 = vunpack.c.l.b16 %v66
  %v115 = vunpack.c.l.b16 %v67
  %v116 = vunpack.c.l.b16 %v68
  %v117 = vunpack.c.l.b16 %v69
  %v118 = vunpack.c.l.b16 %v70
  %v119 = vunpack.c.l.b16 %v71
  %v120 = vpack.c.b16 %v105, %v104
  %v121 = vpack.c.b16 %v107, %v106
  %v122 = vpack.c.b16 %v109, %v108
  %v123 = vpack.c.b16 %v111, %v110
  %v124 = vpack.c.b16 %v113, %v112
  %v125 = vpack.c.b16 %v115, %v114
  %v126 = vpack.c.b16 %v117, %v116
  %v127 = vpack.c.b16 %v119, %v118
  %v152 = vunpack.c.l.b16 %v72
  %v153 = vunpack.c.l.b16 %v73
  %v154 = vunpack.c.l.b16 %v74
  %v155 = vunpack.c.l.b16 %v75
  %v156 = vunpack.c.l.b16 %v76
  %v157 = vunpack.c.l.b16 %v77
  %v158 = vunpack.c.l.b16 %v78
  %v159 = vunpack.c.l.b16 %v79
  %v160 = vunpack.c.l.b16 %v80
  %v161 = vunpack.c.l.b16 %v81
  %v162 = vunpack.c.l.b16 %v82
  %v163 = vunpack.c.l.b16 %v83
  %v164 = vunpack.c.l.b16 %v84
  %v165 = vunpack.c.l.b16 %v85
  %v166 = vunpack.c.l.b16 %v86
  %v167 = vunpack.c.l.b16 %v87
  %v168 = vpack.c.b16 %v153, %v152
  %v169 = vpack.c.b16 %v155, %v154
  %v170 = vpack.c.b16 %v157, %v156
  %v171 = vpack.c.b16 %v159, %v158
  %v172 = vpack.c.b16 %v161, %v160
  %v173 = vpack.c.b16 %v163, %v162
  %v174 = vpack.c.b16 %v165, %v164
  %v175 = vpack.c.b16 %v167, %v166
  %184 = vmatprep.subr.bf16.mxu0 0
  %185 = vmatpush1.bf16.msra.mxu0 %v175
  %186 = vmatprep.subr.bf16.mxu0 0
  %187 = vmatpush1.bf16.msra.mxu0 %v174
  %188 = vmatprep.subr.bf16.mxu0 0
  %189 = vmatpush1.bf16.msra.mxu0 %v173
  %190 = vmatprep.subr.bf16.mxu0 0
  %191 = vmatpush1.bf16.msra.mxu0 %v172
  %192 = vmatprep.subr.bf16.mxu0 0
  %193 = vmatpush1.bf16.msra.mxu0 %v171
  %194 = vmatprep.subr.bf16.mxu0 0
  %195 = vmatpush1.bf16.msra.mxu0 %v170
  %196 = vmatprep.subr.bf16.mxu0 0
  %197 = vmatpush1.bf16.msra.mxu0 %v169
  %198 = vmatprep.subr.bf16.mxu0 0
  %199 = vmatpush1.bf16.msra.mxu0 %v168
  %200 = vmatprep.subr.bf16.mxu0 0
  %201 = vmatpush2.bf16.msra.mxu0 0
  %202 = vmatprep.subr.bf16.mxu0 0
  %203 = vmatpush2.bf16.msra.mxu0 0
  %204 = vmatprep.subr.bf16.mxu0 0
  %205 = vmatpush2.bf16.msra.mxu0 0
  %206 = vmatprep.subr.bf16.mxu0 0
  %207 = vmatpush2.bf16.msra.mxu0 0
  %208 = vmatprep.subr.bf16.mxu0 0
  %209 = vmatpush2.bf16.msra.mxu0 0
  %210 = vmatprep.subr.bf16.mxu0 0
  %211 = vmatpush2.bf16.msra.mxu0 0
  %212 = vmatprep.subr.bf16.mxu0 0
  %213 = vmatpush2.bf16.msra.mxu0 0
  %214 = vmatprep.subr.bf16.mxu0 0
  %215 = vmatpush2.bf16.msra.mxu0 0
  %216 = vmatprep.mubr.bf16.mxu0 0
  %217 = vmatmul.mubr.bf16.gmra.mxu0 %v120
  %v218 = vpop.f32.mrf.mxu0
  %v219 = vadd.f32 0.0, %v218
  %v220 = vpop.f32.mrf.mxu0
  %v221 = vpop.f32.mrf.mxu0
  %v222 = vadd.f32 0.0, %v221
  %v223 = vpop.f32.mrf.mxu0
  %224 = vmatprep.mubr.bf16.mxu0 0
  %225 = vmatmul.mubr.bf16.gmra.mxu0 %v121
  %v226 = vpop.f32.mrf.mxu0
  %v227 = vadd.f32 0.0, %v226
  %v228 = vpop.f32.mrf.mxu0
  %v229 = vpop.f32.mrf.mxu0
  %v230 = vadd.f32 0.0, %v229
  %v231 = vpop.f32.mrf.mxu0
  %232 = vmatprep.mubr.bf16.mxu0 0
  %233 = vmatmul.mubr.bf16.gmra.mxu0 %v122
  %v234 = vpop.f32.mrf.mxu0
  %v235 = vadd.f32 0.0, %v234
  %v236 = vpop.f32.mrf.mxu0
  %v237 = vpop.f32.mrf.mxu0
  %v238 = vadd.f32 0.0, %v237
  %v239 = vpop.f32.mrf.mxu0
  %240 = vmatprep.mubr.bf16.mxu0 0
  %241 = vmatmul.mubr.bf16.gmra.mxu0 %v123
  %v242 = vpop.f32.mrf.mxu0
  %v243 = vadd.f32 0.0, %v242
  %v244 = vpop.f32.mrf.mxu0
  %v245 = vpop.f32.mrf.mxu0
  %v246 = vadd.f32 0.0, %v245
  %v247 = vpop.f32.mrf.mxu0
  %248 = vmatprep.mubr.bf16.mxu0 0
  %249 = vmatmul.mubr.bf16.gmra.mxu0 %v124
  %v250 = vpop.f32.mrf.mxu0
  %v251 = vadd.f32 0.0, %v250
  %v252 = vpop.f32.mrf.mxu0
  %v253 = vpop.f32.mrf.mxu0
  %v254 = vadd.f32 0.0, %v253
  %v255 = vpop.f32.mrf.mxu0
  %256 = vmatprep.mubr.bf16.mxu0 0
  %257 = vmatmul.mubr.bf16.gmra.mxu0 %v125
  %v258 = vpop.f32.mrf.mxu0
  %v259 = vadd.f32 0.0, %v258
  %v260 = vpop.f32.mrf.mxu0
  %v261 = vpop.f32.mrf.mxu0
  %v262 = vadd.f32 0.0, %v261
  %v263 = vpop.f32.mrf.mxu0
  %264 = vmatprep.mubr.bf16.mxu0 0
  %265 = vmatmul.mubr.bf16.gmra.mxu0 %v126
  %v266 = vpop.f32.mrf.mxu0
  %v267 = vadd.f32 0.0, %v266
  %v268 = vpop.f32.mrf.mxu0
  %v269 = vpop.f32.mrf.mxu0
  %v270 = vadd.f32 0.0, %v269
  %v271 = vpop.f32.mrf.mxu0
  %272 = vmatprep.mubr.bf16.mxu0 0
  %273 = vmatmul.mubr.bf16.gmra.mxu0 %v127
  %v274 = vpop.f32.mrf.mxu0
  %v275 = vadd.f32 0.0, %v274
  %v276 = vpop.f32.mrf.mxu0
  %v277 = vpop.f32.mrf.mxu0
  %v278 = vadd.f32 0.0, %v277
  %v279 = vpop.f32.mrf.mxu0
  %280 = vdwg.mxu0
  %v281 = vadd.f32 %v40, %v219
  %v282 = vadd.f32 %v41, %v222
  %v283 = vadd.f32 %v42, %v227
  %v284 = vadd.f32 %v43, %v230
  %v285 = vadd.f32 %v44, %v235
  %v286 = vadd.f32 %v45, %v238
  %v287 = vadd.f32 %v46, %v243
  %v288 = vadd.f32 %v47, %v246
  %v289 = vadd.f32 %v48, %v251
  %v290 = vadd.f32 %v49, %v254
  %v291 = vadd.f32 %v50, %v259
  %v292 = vadd.f32 %v51, %v262
  %v293 = vadd.f32 %v52, %v267
  %v294 = vadd.f32 %v53, %v270
  %v295 = vadd.f32 %v54, %v275
  %v296 = vadd.f32 %v55, %v278
  %297 = vst [vmem:[#allocation2] sm:$0xff] %v281
  %298 = vst [vmem:[#allocation2 + $0x8] sm:$0xff] %v282
  %299 = vst [vmem:[#allocation2 + $0x10] sm:$0xff] %v283
  %300 = vst [vmem:[#allocation2 + $0x18] sm:$0xff] %v284
  %301 = vst [vmem:[#allocation2 + $0x20] sm:$0xff] %v285
  %302 = vst [vmem:[#allocation2 + $0x28] sm:$0xff] %v286
  %303 = vst [vmem:[#allocation2 + $0x30] sm:$0xff] %v287
  %304 = vst [vmem:[#allocation2 + $0x38] sm:$0xff] %v288
  %305 = vst [vmem:[#allocation2 + $0x40] sm:$0xff] %v289
  %306 = vst [vmem:[#allocation2 + $0x48] sm:$0xff] %v290
  %307 = vst [vmem:[#allocation2 + $0x50] sm:$0xff] %v291
  %308 = vst [vmem:[#allocation2 + $0x58] sm:$0xff] %v292
  %309 = vst [vmem:[#allocation2 + $0x60] sm:$0xff] %v293
  %310 = vst [vmem:[#allocation2 + $0x68] sm:$0xff] %v294
  %311 = vst [vmem:[#allocation2 + $0x70] sm:$0xff] %v295
  %312 = vst [vmem:[#allocation2 + $0x78] sm:$0xff] %v296
  // Predicated region
  $region22: #{gcn_with_jk_forward.8} parent=0 // pred_check
    %p313 = pneg %p20
  $region23: #{gcn_with_jk_forward.8} parent=0 // pred_check_branch
    %315 = sbr.rel (%p313) target = $region25
  $region24: #{gcn_with_jk_forward.8} parent=0 // pred_region
    %v316 = vld [vmem:[#allocation2] sm:$0xff]
    %v317 = vld [vmem:[#allocation2 + $0x8] sm:$0xff]
    %v318 = vld [vmem:[#allocation2 + $0x10] sm:$0xff]
    %v319 = vld [vmem:[#allocation2 + $0x18] sm:$0xff]
    %v320 = vld [vmem:[#allocation2 + $0x20] sm:$0xff]
    %v321 = vld [vmem:[#allocation2 + $0x28] sm:$0xff]
    %v322 = vld [vmem:[#allocation2 + $0x30] sm:$0xff]
    %v323 = vld [vmem:[#allocation2 + $0x38] sm:$0xff]
    %v324 = vld [vmem:[#allocation2 + $0x40] sm:$0xff]
    %v325 = vld [vmem:[#allocation2 + $0x48] sm:$0xff]
    %v326 = vld [vmem:[#allocation2 + $0x50] sm:$0xff]
    %v327 = vld [vmem:[#allocation2 + $0x58] sm:$0xff]
    %v328 = vld [vmem:[#allocation2 + $0x60] sm:$0xff]
    %v329 = vld [vmem:[#allocation2 + $0x68] sm:$0xff]
    %v330 = vld [vmem:[#allocation2 + $0x70] sm:$0xff]
    %v331 = vld [vmem:[#allocation2 + $0x78] sm:$0xff]
    %v332 = vld [vmem:[%s2] sm:$0x1]
    %v334 = vlaneseq
    %v335 = vshrl.u32 %v334, 7
    %v336 = vsub.s32 0, %v335
    %v337 = vrot.slane %v332, %v336
    %v339 = vadd.f32 %v316, %v337
    %v340 = vadd.f32 %v317, %v337
    %v341 = vadd.f32 %v318, %v337
    %v342 = vadd.f32 %v319, %v337
    %v343 = vadd.f32 %v320, %v337
    %v344 = vadd.f32 %v321, %v337
    %v345 = vadd.f32 %v322, %v337
    %v346 = vadd.f32 %v323, %v337
    %v347 = vadd.f32 %v324, %v337
    %v348 = vadd.f32 %v325, %v337
    %v349 = vadd.f32 %v326, %v337
    %v350 = vadd.f32 %v327, %v337
    %v351 = vadd.f32 %v328, %v337
    %v352 = vadd.f32 %v329, %v337
    %v353 = vadd.f32 %v330, %v337
    %v354 = vadd.f32 %v331, %v337
    %v355 = vmax.f32 %v339, 0.0
    %v356 = vmax.f32 %v340, 0.0
    %v357 = vmax.f32 %v341, 0.0
    %v358 = vmax.f32 %v342, 0.0
    %v359 = vmax.f32 %v343, 0.0
    %v360 = vmax.f32 %v344, 0.0
    %v361 = vmax.f32 %v345, 0.0
    %v362 = vmax.f32 %v346, 0.0
    %v363 = vmax.f32 %v347, 0.0
    %v364 = vmax.f32 %v348, 0.0
    %v365 = vmax.f32 %v349, 0.0
    %v366 = vmax.f32 %v350, 0.0
    %v367 = vmax.f32 %v351, 0.0
    %v368 = vmax.f32 %v352, 0.0
    %v369 = vmax.f32 %v353, 0.0
    %v370 = vmax.f32 %v354, 0.0
    %v371 = vpack.c.bf16 %v356, %v355
    %v372 = vpack.c.bf16 %v358, %v357
    %v373 = vpack.c.bf16 %v360, %v359
    %v374 = vpack.c.bf16 %v362, %v361
    %v375 = vpack.c.bf16 %v364, %v363
    %v376 = vpack.c.bf16 %v366, %v365
    %v377 = vpack.c.bf16 %v368, %v367
    %v378 = vpack.c.bf16 %v370, %v369
    %v387 = vunpack.c.l.b16 %v371
    %v388 = vunpack.c.h.b16 %v371
    %v389 = vunpack.c.l.b16 %v372
    %v390 = vunpack.c.h.b16 %v372
    %v391 = vunpack.c.l.b16 %v373
    %v392 = vunpack.c.h.b16 %v373
    %v393 = vunpack.c.l.b16 %v374
    %v394 = vunpack.c.h.b16 %v374
    %v395 = vunpack.c.l.b16 %v375
    %v396 = vunpack.c.h.b16 %v375
    %v397 = vunpack.c.l.b16 %v376
    %v398 = vunpack.c.h.b16 %v376
    %v399 = vunpack.c.l.b16 %v377
    %v400 = vunpack.c.h.b16 %v377
    %v401 = vunpack.c.l.b16 %v378
    %v402 = vunpack.c.h.b16 %v378
    %v403 = vpack.c.b16 %v387, %v387
    %v404 = vpack.c.b16 %v388, %v388
    %v405 = vpack.c.b16 %v389, %v389
    %v406 = vpack.c.b16 %v390, %v390
    %v407 = vpack.c.b16 %v391, %v391
    %v408 = vpack.c.b16 %v392, %v392
    %v409 = vpack.c.b16 %v393, %v393
    %v410 = vpack.c.b16 %v394, %v394
    %v411 = vpack.c.b16 %v395, %v395
    %v412 = vpack.c.b16 %v396, %v396
    %v413 = vpack.c.b16 %v397, %v397
    %v414 = vpack.c.b16 %v398, %v398
    %v415 = vpack.c.b16 %v399, %v399
    %v416 = vpack.c.b16 %v400, %v400
    %v417 = vpack.c.b16 %v401, %v401
    %v418 = vpack.c.b16 %v402, %v402
    %435 = vst [vmem:[%s4] sm:$0xf] %v403
    %436 = vst [vmem:[%s4 + $0x4] sm:$0xf] %v404
    %437 = vst [vmem:[%s4 + $0x8] sm:$0xf] %v405
    %438 = vst [vmem:[%s4 + $0xc] sm:$0xf] %v406
    %439 = vst [vmem:[%s4 + $0x10] sm:$0xf] %v407
    %440 = vst [vmem:[%s4 + $0x14] sm:$0xf] %v408
    %441 = vst [vmem:[%s4 + $0x18] sm:$0xf] %v409
    %442 = vst [vmem:[%s4 + $0x1c] sm:$0xf] %v410
    %443 = vst [vmem:[%s4 + $0x20] sm:$0xf] %v411
    %444 = vst [vmem:[%s4 + $0x24] sm:$0xf] %v412
    %445 = vst [vmem:[%s4 + $0x28] sm:$0xf] %v413
    %446 = vst [vmem:[%s4 + $0x2c] sm:$0xf] %v414
    %447 = vst [vmem:[%s4 + $0x30] sm:$0xf] %v415
    %448 = vst [vmem:[%s4 + $0x34] sm:$0xf] %v416
    %449 = vst [vmem:[%s4 + $0x38] sm:$0xf] %v417
    %450 = vst [vmem:[%s4 + $0x3c] sm:$0xf] %v418
    %v451 = vld [vmem:[%s3] sm:$0xff]
    %v452 = vld [vmem:[%s3 + $0x8] sm:$0xff]
    %v453 = vld [vmem:[%s3 + $0x10] sm:$0xff]
    %v454 = vld [vmem:[%s3 + $0x18] sm:$0xff]
    %v455 = vld [vmem:[%s3 + $0x20] sm:$0xff]
    %v456 = vld [vmem:[%s3 + $0x28] sm:$0xff]
    %v457 = vld [vmem:[%s3 + $0x30] sm:$0xff]
    %v458 = vld [vmem:[%s3 + $0x38] sm:$0xff]
    %v459 = vld [vmem:[%s3 + $0x40] sm:$0xff]
    %v460 = vld [vmem:[%s3 + $0x48] sm:$0xff]
    %v461 = vld [vmem:[%s3 + $0x50] sm:$0xff]
    %v462 = vld [vmem:[%s3 + $0x58] sm:$0xff]
    %v463 = vld [vmem:[%s3 + $0x60] sm:$0xff]
    %v464 = vld [vmem:[%s3 + $0x68] sm:$0xff]
    %v465 = vld [vmem:[%s3 + $0x70] sm:$0xff]
    %v466 = vld [vmem:[%s3 + $0x78] sm:$0xff]
    %v467 = vmul.f32 %v355, 0.33333334
    %v468 = vmul.f32 %v356, 0.33333334
    %v469 = vmul.f32 %v357, 0.33333334
    %v470 = vmul.f32 %v358, 0.33333334
    %v471 = vmul.f32 %v359, 0.33333334
    %v472 = vmul.f32 %v360, 0.33333334
    %v473 = vmul.f32 %v361, 0.33333334
    %v474 = vmul.f32 %v362, 0.33333334
    %v475 = vmul.f32 %v363, 0.33333334
    %v476 = vmul.f32 %v364, 0.33333334
    %v477 = vmul.f32 %v365, 0.33333334
    %v478 = vmul.f32 %v366, 0.33333334
    %v479 = vmul.f32 %v367, 0.33333334
    %v480 = vmul.f32 %v368, 0.33333334
    %v481 = vmul.f32 %v369, 0.33333334
    %v482 = vmul.f32 %v370, 0.33333334
    %v483 = vadd.f32 %v451, %v467
    %v484 = vadd.f32 %v452, %v468
    %v485 = vadd.f32 %v453, %v469
    %v486 = vadd.f32 %v454, %v470
    %v487 = vadd.f32 %v455, %v471
    %v488 = vadd.f32 %v456, %v472
    %v489 = vadd.f32 %v457, %v473
    %v490 = vadd.f32 %v458, %v474
    %v491 = vadd.f32 %v459, %v475
    %v492 = vadd.f32 %v460, %v476
    %v493 = vadd.f32 %v461, %v477
    %v494 = vadd.f32 %v462, %v478
    %v495 = vadd.f32 %v463, %v479
    %v496 = vadd.f32 %v464, %v480
    %v497 = vadd.f32 %v465, %v481
    %v498 = vadd.f32 %v466, %v482
    %499 = vst [vmem:[%s5] sm:$0xff] %v483
    %500 = vst [vmem:[%s5 + $0x8] sm:$0xff] %v484
    %501 = vst [vmem:[%s5 + $0x10] sm:$0xff] %v485
    %502 = vst [vmem:[%s5 + $0x18] sm:$0xff] %v486
    %503 = vst [vmem:[%s5 + $0x20] sm:$0xff] %v487
    %504 = vst [vmem:[%s5 + $0x28] sm:$0xff] %v488
    %505 = vst [vmem:[%s5 + $0x30] sm:$0xff] %v489
    %506 = vst [vmem:[%s5 + $0x38] sm:$0xff] %v490
    %507 = vst [vmem:[%s5 + $0x40] sm:$0xff] %v491
    %508 = vst [vmem:[%s5 + $0x48] sm:$0xff] %v492
    %509 = vst [vmem:[%s5 + $0x50] sm:$0xff] %v493
    %510 = vst [vmem:[%s5 + $0x58] sm:$0xff] %v494
    %511 = vst [vmem:[%s5 + $0x60] sm:$0xff] %v495
    %512 = vst [vmem:[%s5 + $0x68] sm:$0xff] %v496
    %513 = vst [vmem:[%s5 + $0x70] sm:$0xff] %v497
    %514 = vst [vmem:[%s5 + $0x78] sm:$0xff] %v498
  $region25: #{gcn_with_jk_forward.8} parent=0 // pred_fallthru
    _
  // Predicated region
  $region26: #{gcn_with_jk_forward.8} parent=0 // pred_check
    _
  $region27: #{gcn_with_jk_forward.8} parent=0 // pred_check_branch
    %516 = sbr.rel (0) target = $region29
  $region28: #{gcn_with_jk_forward.8} parent=0 // pred_region
    _
  $region29: #{gcn_with_jk_forward.8} parent=0 // pred_fallthru
    _
  // Predicated region
  $region30: #{gcn_with_jk_forward.8} parent=0 // pred_check
    _
  $region31: #{gcn_with_jk_forward.8} parent=0 // pred_check_branch
    %518 = sbr.rel (0) target = $region33
  $region32: #{gcn_with_jk_forward.8} parent=0 // pred_region
    _
  $region33: #{gcn_with_jk_forward.8} parent=0 // pred_fallthru
    _
  // Predicated region
  $region34: #{gcn_with_jk_forward.8} parent=0 // pred_check
    _
  $region35: #{gcn_with_jk_forward.8} parent=0 // pred_check_branch
    %520 = sbr.rel (0) target = $region37
  $region36: #{gcn_with_jk_forward.8} parent=0 // pred_region
    _
  $region37: #{gcn_with_jk_forward.8} parent=0 // pred_fallthru
    _
  // Predicated region
  $region38: #{gcn_with_jk_forward.8} parent=0 // pred_check
    _
  $region39: #{gcn_with_jk_forward.8} parent=0 // pred_check_branch
    %522 = sbr.rel (0) target = $region41
  $region40: #{gcn_with_jk_forward.8} parent=0 // pred_region
    _
  $region41: #{gcn_with_jk_forward.8} parent=0 // pred_fallthru
    _

// kernel: gcn_with_jk_forward.12
$region0: #{gcn_with_jk_forward.12}
  #allocation0 [shape = 'u32[]', space=smem, size = 0x4, offset = 0x4, fixed_abs, tag = 'smem constant byte address 0x4 - core index']
  #allocation1 [shape = 'u32[144,128]{1,0:T(1,128)}', space=vmem, size = 0x12000, scoped, tag = 'internal scratch']
  #allocation2 [shape = 'f32[128,128]{1,0:T(8,128)}', space=vmem, size = 0x10000, scoped, tag = 'scratch operand']
  %s0 = inlined_call_operand.vmem [shape: bf16[128,128], index: 0, kind: input, shape index: {}]
  %s1 = inlined_call_operand.vmem [shape: bf16[128,128], index: 1, kind: input, shape index: {}]
  %s2 = inlined_call_operand.vmem [shape: f32[1,128], index: 2, kind: input, shape index: {}]
  %s3 = inlined_call_operand.vmem [shape: f32[128,128], index: 3, kind: input, shape index: {}, may-alias: {3,5}]
  %s4 = inlined_call_operand.hbm [shape: bf16[128,128], index: 4, kind: output, shape index: {0}]
  %s5 = inlined_call_operand.vmem [shape: f32[128,128], index: 5, kind: output, shape index: {1}, may-alias: {3,5}]
  %6 = xla_tuple %s4, %s5
  %s7 = sld [smem:[#allocation0]]
  $region42: #{gcn_with_jk_forward.12} parent=0
    _
  %s9 = ssub.s32 1, %s7
  %s10 = scalar_select 0, %s9, %s7
  $region1: #{gcn_with_jk_forward.12} parent=0
    #allocation3 [shape = 'u8[32768]{0}', space=vmem, size = 0x8000, scoped, tag = 'output window, operand 0, single buffered']
    #allocation4 [shape = 's32[1]{0}', space=sflag, size = 0x4, scoped, tag = 'scoped memory for gcn_with_jk_forward.12']
    %11 = vsyncpa [#allocation4], 0
    // Predicated region
    $region2: #{gcn_with_jk_forward.12} parent=1 // pred_check
      _
    $region3: #{gcn_with_jk_forward.12} parent=1 // pred_check_branch
      %13 = sbr.rel (0) target = $region5
    $region4: #{gcn_with_jk_forward.12} parent=1 // pred_region
      _
    $region5: #{gcn_with_jk_forward.12} parent=1 // pred_fallthru
      _
    // Predicated region
    $region6: #{gcn_with_jk_forward.12} parent=1 // pred_check
      _
    $region7: #{gcn_with_jk_forward.12} parent=1 // pred_check_branch
      %15 = sbr.rel (0) target = $region9
    $region8: #{gcn_with_jk_forward.12} parent=1 // pred_region
      _
    $region9: #{gcn_with_jk_forward.12} parent=1 // pred_fallthru
      _
    // Predicated region
    $region10: #{gcn_with_jk_forward.12} parent=1 // pred_check
      _
    $region11: #{gcn_with_jk_forward.12} parent=1 // pred_check_branch
      %17 = sbr.rel (0) target = $region13
    $region12: #{gcn_with_jk_forward.12} parent=1 // pred_region
      _
    $region13: #{gcn_with_jk_forward.12} parent=1 // pred_fallthru
      _
    // Predicated region
    $region14: #{gcn_with_jk_forward.12} parent=1 // pred_check
      _
    $region15: #{gcn_with_jk_forward.12} parent=1 // pred_check_branch
      %19 = sbr.rel (0) target = $region17
    $region16: #{gcn_with_jk_forward.12} parent=1 // pred_region
      _
    $region17: #{gcn_with_jk_forward.12} parent=1 // pred_fallthru
      _
    %p21 = scmp.eq.s32.totalorder 0, 0
    // Predicated region
    $region18: #{gcn_with_jk_forward.12} parent=1 // pred_check
      %p22 = pneg %p21
    $region19: #{gcn_with_jk_forward.12} parent=1 // pred_check_branch
      %24 = sbr.rel (%p22) target = $region21
    $region20: #{gcn_with_jk_forward.12} parent=1 // pred_region
      %25 = vst [vmem:[#allocation2] sm:$0xff] 0.0
      %26 = vst [vmem:[#allocation2 + $0x8] sm:$0xff] 0.0
      %27 = vst [vmem:[#allocation2 + $0x10] sm:$0xff] 0.0
      %28 = vst [vmem:[#allocation2 + $0x18] sm:$0xff] 0.0
      %29 = vst [vmem:[#allocation2 + $0x20] sm:$0xff] 0.0
      %30 = vst [vmem:[#allocation2 + $0x28] sm:$0xff] 0.0
      %31 = vst [vmem:[#allocation2 + $0x30] sm:$0xff] 0.0
      %32 = vst [vmem:[#allocation2 + $0x38] sm:$0xff] 0.0
      %33 = vst [vmem:[#allocation2 + $0x40] sm:$0xff] 0.0
      %34 = vst [vmem:[#allocation2 + $0x48] sm:$0xff] 0.0
      %35 = vst [vmem:[#allocation2 + $0x50] sm:$0xff] 0.0
      %36 = vst [vmem:[#allocation2 + $0x58] sm:$0xff] 0.0
      %37 = vst [vmem:[#allocation2 + $0x60] sm:$0xff] 0.0
      %38 = vst [vmem:[#allocation2 + $0x68] sm:$0xff] 0.0
      %39 = vst [vmem:[#allocation2 + $0x70] sm:$0xff] 0.0
      %40 = vst [vmem:[#allocation2 + $0x78] sm:$0xff] 0.0
    $region21: #{gcn_with_jk_forward.12} parent=1 // pred_fallthru
      _
    %v41 = vld [vmem:[#allocation2] sm:$0xff]
    %v42 = vld [vmem:[#allocation2 + $0x8] sm:$0xff]
    %v43 = vld [vmem:[#allocation2 + $0x10] sm:$0xff]
    %v44 = vld [vmem:[#allocation2 + $0x18] sm:$0xff]
    %v45 = vld [vmem:[#allocation2 + $0x20] sm:$0xff]
    %v46 = vld [vmem:[#allocation2 + $0x28] sm:$0xff]
    %v47 = vld [vmem:[#allocation2 + $0x30] sm:$0xff]
    %v48 = vld [vmem:[#allocation2 + $0x38] sm:$0xff]
    %v49 = vld [vmem:[#allocation2 + $0x40] sm:$0xff]
    %v50 = vld [vmem:[#allocation2 + $0x48] sm:$0xff]
    %v51 = vld [vmem:[#allocation2 + $0x50] sm:$0xff]
    %v52 = vld [vmem:[#allocation2 + $0x58] sm:$0xff]
    %v53 = vld [vmem:[#allocation2 + $0x60] sm:$0xff]
    %v54 = vld [vmem:[#allocation2 + $0x68] sm:$0xff]
    %v55 = vld [vmem:[#allocation2 + $0x70] sm:$0xff]
    %v56 = vld [vmem:[#allocation2 + $0x78] sm:$0xff]
    %v57 = vld [vmem:[%s0] sm:$0xf]
    %v58 = vld [vmem:[%s0 + $0x4] sm:$0xf]
    %v59 = vld [vmem:[%s0 + $0x8] sm:$0xf]
    %v60 = vld [vmem:[%s0 + $0xc] sm:$0xf]
    %v61 = vld [vmem:[%s0 + $0x10] sm:$0xf]
    %v62 = vld [vmem:[%s0 + $0x14] sm:$0xf]
    %v63 = vld [vmem:[%s0 + $0x18] sm:$0xf]
    %v64 = vld [vmem:[%s0 + $0x1c] sm:$0xf]
    %v65 = vld [vmem:[%s0 + $0x20] sm:$0xf]
    %v66 = vld [vmem:[%s0 + $0x24] sm:$0xf]
    %v67 = vld [vmem:[%s0 + $0x28] sm:$0xf]
    %v68 = vld [vmem:[%s0 + $0x2c] sm:$0xf]
    %v69 = vld [vmem:[%s0 + $0x30] sm:$0xf]
    %v70 = vld [vmem:[%s0 + $0x34] sm:$0xf]
    %v71 = vld [vmem:[%s0 + $0x38] sm:$0xf]
    %v72 = vld [vmem:[%s0 + $0x3c] sm:$0xf]
    %v73 = vld [vmem:[%s1] sm:$0xf]
    %v74 = vld [vmem:[%s1 + $0x4] sm:$0xf]
    %v75 = vld [vmem:[%s1 + $0x8] sm:$0xf]
    %v76 = vld [vmem:[%s1 + $0xc] sm:$0xf]
    %v77 = vld [vmem:[%s1 + $0x10] sm:$0xf]
    %v78 = vld [vmem:[%s1 + $0x14] sm:$0xf]
    %v79 = vld [vmem:[%s1 + $0x18] sm:$0xf]
    %v80 = vld [vmem:[%s1 + $0x1c] sm:$0xf]
    %v81 = vld [vmem:[%s1 + $0x20] sm:$0xf]
    %v82 = vld [vmem:[%s1 + $0x24] sm:$0xf]
    %v83 = vld [vmem:[%s1 + $0x28] sm:$0xf]
    %v84 = vld [vmem:[%s1 + $0x2c] sm:$0xf]
    %v85 = vld [vmem:[%s1 + $0x30] sm:$0xf]
    %v86 = vld [vmem:[%s1 + $0x34] sm:$0xf]
    %v87 = vld [vmem:[%s1 + $0x38] sm:$0xf]
    %v88 = vld [vmem:[%s1 + $0x3c] sm:$0xf]
    %v105 = vunpack.c.l.b16 %v57
    %v106 = vunpack.c.l.b16 %v58
    %v107 = vunpack.c.l.b16 %v59
    %v108 = vunpack.c.l.b16 %v60
    %v109 = vunpack.c.l.b16 %v61
    %v110 = vunpack.c.l.b16 %v62
    %v111 = vunpack.c.l.b16 %v63
    %v112 = vunpack.c.l.b16 %v64
    %v113 = vunpack.c.l.b16 %v65
    %v114 = vunpack.c.l.b16 %v66
    %v115 = vunpack.c.l.b16 %v67
    %v116 = vunpack.c.l.b16 %v68
    %v117 = vunpack.c.l.b16 %v69
    %v118 = vunpack.c.l.b16 %v70
    %v119 = vunpack.c.l.b16 %v71
    %v120 = vunpack.c.l.b16 %v72
    %v121 = vpack.c.b16 %v106, %v105
    %v122 = vpack.c.b16 %v108, %v107
    %v123 = vpack.c.b16 %v110, %v109
    %v124 = vpack.c.b16 %v112, %v111
    %v125 = vpack.c.b16 %v114, %v113
    %v126 = vpack.c.b16 %v116, %v115
    %v127 = vpack.c.b16 %v118, %v117
    %v128 = vpack.c.b16 %v120, %v119
    %v153 = vunpack.c.l.b16 %v73
    %v154 = vunpack.c.l.b16 %v74
    %v155 = vunpack.c.l.b16 %v75
    %v156 = vunpack.c.l.b16 %v76
    %v157 = vunpack.c.l.b16 %v77
    %v158 = vunpack.c.l.b16 %v78
    %v159 = vunpack.c.l.b16 %v79
    %v160 = vunpack.c.l.b16 %v80
    %v161 = vunpack.c.l.b16 %v81
    %v162 = vunpack.c.l.b16 %v82
    %v163 = vunpack.c.l.b16 %v83
    %v164 = vunpack.c.l.b16 %v84
    %v165 = vunpack.c.l.b16 %v85
    %v166 = vunpack.c.l.b16 %v86
    %v167 = vunpack.c.l.b16 %v87
    %v168 = vunpack.c.l.b16 %v88
    %v169 = vpack.c.b16 %v154, %v153
    %v170 = vpack.c.b16 %v156, %v155
    %v171 = vpack.c.b16 %v158, %v157
    %v172 = vpack.c.b16 %v160, %v159
    %v173 = vpack.c.b16 %v162, %v161
    %v174 = vpack.c.b16 %v164, %v163
    %v175 = vpack.c.b16 %v166, %v165
    %v176 = vpack.c.b16 %v168, %v167
    %185 = vmatprep.subr.bf16.mxu0 0
    %186 = vmatpush1.bf16.msra.mxu0 %v176
    %187 = vmatprep.subr.bf16.mxu0 0
    %188 = vmatpush1.bf16.msra.mxu0 %v175
    %189 = vmatprep.subr.bf16.mxu0 0
    %190 = vmatpush1.bf16.msra.mxu0 %v174
    %191 = vmatprep.subr.bf16.mxu0 0
    %192 = vmatpush1.bf16.msra.mxu0 %v173
    %193 = vmatprep.subr.bf16.mxu0 0
    %194 = vmatpush1.bf16.msra.mxu0 %v172
    %195 = vmatprep.subr.bf16.mxu0 0
    %196 = vmatpush1.bf16.msra.mxu0 %v171
    %197 = vmatprep.subr.bf16.mxu0 0
    %198 = vmatpush1.bf16.msra.mxu0 %v170
    %199 = vmatprep.subr.bf16.mxu0 0
    %200 = vmatpush1.bf16.msra.mxu0 %v169
    %201 = vmatprep.subr.bf16.mxu0 0
    %202 = vmatpush2.bf16.msra.mxu0 0
    %203 = vmatprep.subr.bf16.mxu0 0
    %204 = vmatpush2.bf16.msra.mxu0 0
    %205 = vmatprep.subr.bf16.mxu0 0
    %206 = vmatpush2.bf16.msra.mxu0 0
    %207 = vmatprep.subr.bf16.mxu0 0
    %208 = vmatpush2.bf16.msra.mxu0 0
    %209 = vmatprep.subr.bf16.mxu0 0
    %210 = vmatpush2.bf16.msra.mxu0 0
    %211 = vmatprep.subr.bf16.mxu0 0
    %212 = vmatpush2.bf16.msra.mxu0 0
    %213 = vmatprep.subr.bf16.mxu0 0
    %214 = vmatpush2.bf16.msra.mxu0 0
    %215 = vmatprep.subr.bf16.mxu0 0
    %216 = vmatpush2.bf16.msra.mxu0 0
    %217 = vmatprep.mubr.bf16.mxu0 0
    %218 = vmatmul.mubr.bf16.gmra.mxu0 %v121
    %v219 = vpop.f32.mrf.mxu0
    %v220 = vadd.f32 0.0, %v219
    %v221 = vpop.f32.mrf.mxu0
    %v222 = vpop.f32.mrf.mxu0
    %v223 = vadd.f32 0.0, %v222
    %v224 = vpop.f32.mrf.mxu0
    %225 = vmatprep.mubr.bf16.mxu0 0
    %226 = vmatmul.mubr.bf16.gmra.mxu0 %v122
    %v227 = vpop.f32.mrf.mxu0
    %v228 = vadd.f32 0.0, %v227
    %v229 = vpop.f32.mrf.mxu0
    %v230 = vpop.f32.mrf.mxu0
    %v231 = vadd.f32 0.0, %v230
    %v232 = vpop.f32.mrf.mxu0
    %233 = vmatprep.mubr.bf16.mxu0 0
    %234 = vmatmul.mubr.bf16.gmra.mxu0 %v123
    %v235 = vpop.f32.mrf.mxu0
    %v236 = vadd.f32 0.0, %v235
    %v237 = vpop.f32.mrf.mxu0
    %v238 = vpop.f32.mrf.mxu0
    %v239 = vadd.f32 0.0, %v238
    %v240 = vpop.f32.mrf.mxu0
    %241 = vmatprep.mubr.bf16.mxu0 0
    %242 = vmatmul.mubr.bf16.gmra.mxu0 %v124
    %v243 = vpop.f32.mrf.mxu0
    %v244 = vadd.f32 0.0, %v243
    %v245 = vpop.f32.mrf.mxu0
    %v246 = vpop.f32.mrf.mxu0
    %v247 = vadd.f32 0.0, %v246
    %v248 = vpop.f32.mrf.mxu0
    %249 = vmatprep.mubr.bf16.mxu0 0
    %250 = vmatmul.mubr.bf16.gmra.mxu0 %v125
    %v251 = vpop.f32.mrf.mxu0
    %v252 = vadd.f32 0.0, %v251
    %v253 = vpop.f32.mrf.mxu0
    %v254 = vpop.f32.mrf.mxu0
    %v255 = vadd.f32 0.0, %v254
    %v256 = vpop.f32.mrf.mxu0
    %257 = vmatprep.mubr.bf16.mxu0 0
    %258 = vmatmul.mubr.bf16.gmra.mxu0 %v126
    %v259 = vpop.f32.mrf.mxu0
    %v260 = vadd.f32 0.0, %v259
    %v261 = vpop.f32.mrf.mxu0
    %v262 = vpop.f32.mrf.mxu0
    %v263 = vadd.f32 0.0, %v262
    %v264 = vpop.f32.mrf.mxu0
    %265 = vmatprep.mubr.bf16.mxu0 0
    %266 = vmatmul.mubr.bf16.gmra.mxu0 %v127
    %v267 = vpop.f32.mrf.mxu0
    %v268 = vadd.f32 0.0, %v267
    %v269 = vpop.f32.mrf.mxu0
    %v270 = vpop.f32.mrf.mxu0
    %v271 = vadd.f32 0.0, %v270
    %v272 = vpop.f32.mrf.mxu0
    %273 = vmatprep.mubr.bf16.mxu0 0
    %274 = vmatmul.mubr.bf16.gmra.mxu0 %v128
    %v275 = vpop.f32.mrf.mxu0
    %v276 = vadd.f32 0.0, %v275
    %v277 = vpop.f32.mrf.mxu0
    %v278 = vpop.f32.mrf.mxu0
    %v279 = vadd.f32 0.0, %v278
    %v280 = vpop.f32.mrf.mxu0
    %281 = vdwg.mxu0
    %v282 = vadd.f32 %v41, %v220
    %v283 = vadd.f32 %v42, %v223
    %v284 = vadd.f32 %v43, %v228
    %v285 = vadd.f32 %v44, %v231
    %v286 = vadd.f32 %v45, %v236
    %v287 = vadd.f32 %v46, %v239
    %v288 = vadd.f32 %v47, %v244
    %v289 = vadd.f32 %v48, %v247
    %v290 = vadd.f32 %v49, %v252
    %v291 = vadd.f32 %v50, %v255
    %v292 = vadd.f32 %v51, %v260
    %v293 = vadd.f32 %v52, %v263
    %v294 = vadd.f32 %v53, %v268
    %v295 = vadd.f32 %v54, %v271
    %v296 = vadd.f32 %v55, %v276
    %v297 = vadd.f32 %v56, %v279
    %298 = vst [vmem:[#allocation2] sm:$0xff] %v282
    %299 = vst [vmem:[#allocation2 + $0x8] sm:$0xff] %v283
    %300 = vst [vmem:[#allocation2 + $0x10] sm:$0xff] %v284
    %301 = vst [vmem:[#allocation2 + $0x18] sm:$0xff] %v285
    %302 = vst [vmem:[#allocation2 + $0x20] sm:$0xff] %v286
    %303 = vst [vmem:[#allocation2 + $0x28] sm:$0xff] %v287
    %304 = vst [vmem:[#allocation2 + $0x30] sm:$0xff] %v288
    %305 = vst [vmem:[#allocation2 + $0x38] sm:$0xff] %v289
    %306 = vst [vmem:[#allocation2 + $0x40] sm:$0xff] %v290
    %307 = vst [vmem:[#allocation2 + $0x48] sm:$0xff] %v291
    %308 = vst [vmem:[#allocation2 + $0x50] sm:$0xff] %v292
    %309 = vst [vmem:[#allocation2 + $0x58] sm:$0xff] %v293
    %310 = vst [vmem:[#allocation2 + $0x60] sm:$0xff] %v294
    %311 = vst [vmem:[#allocation2 + $0x68] sm:$0xff] %v295
    %312 = vst [vmem:[#allocation2 + $0x70] sm:$0xff] %v296
    %313 = vst [vmem:[#allocation2 + $0x78] sm:$0xff] %v297
    // Predicated region
    $region22: #{gcn_with_jk_forward.12} parent=1 // pred_check
      %p314 = pneg %p21
    $region23: #{gcn_with_jk_forward.12} parent=1 // pred_check_branch
      %316 = sbr.rel (%p314) target = $region25
    $region24: #{gcn_with_jk_forward.12} parent=1 // pred_region
      %v317 = vld [vmem:[#allocation2] sm:$0xff]
      %v318 = vld [vmem:[#allocation2 + $0x8] sm:$0xff]
      %v319 = vld [vmem:[#allocation2 + $0x10] sm:$0xff]
      %v320 = vld [vmem:[#allocation2 + $0x18] sm:$0xff]
      %v321 = vld [vmem:[#allocation2 + $0x20] sm:$0xff]
      %v322 = vld [vmem:[#allocation2 + $0x28] sm:$0xff]
      %v323 = vld [vmem:[#allocation2 + $0x30] sm:$0xff]
      %v324 = vld [vmem:[#allocation2 + $0x38] sm:$0xff]
      %v325 = vld [vmem:[#allocation2 + $0x40] sm:$0xff]
      %v326 = vld [vmem:[#allocation2 + $0x48] sm:$0xff]
      %v327 = vld [vmem:[#allocation2 + $0x50] sm:$0xff]
      %v328 = vld [vmem:[#allocation2 + $0x58] sm:$0xff]
      %v329 = vld [vmem:[#allocation2 + $0x60] sm:$0xff]
      %v330 = vld [vmem:[#allocation2 + $0x68] sm:$0xff]
      %v331 = vld [vmem:[#allocation2 + $0x70] sm:$0xff]
      %v332 = vld [vmem:[#allocation2 + $0x78] sm:$0xff]
      %v333 = vld [vmem:[%s2] sm:$0x1]
      %v335 = vlaneseq
      %v336 = vshrl.u32 %v335, 7
      %v337 = vsub.s32 0, %v336
      %v338 = vrot.slane %v333, %v337
      %v340 = vadd.f32 %v317, %v338
      %v341 = vadd.f32 %v318, %v338
      %v342 = vadd.f32 %v319, %v338
      %v343 = vadd.f32 %v320, %v338
      %v344 = vadd.f32 %v321, %v338
      %v345 = vadd.f32 %v322, %v338
      %v346 = vadd.f32 %v323, %v338
      %v347 = vadd.f32 %v324, %v338
      %v348 = vadd.f32 %v325, %v338
      %v349 = vadd.f32 %v326, %v338
      %v350 = vadd.f32 %v327, %v338
      %v351 = vadd.f32 %v328, %v338
      %v352 = vadd.f32 %v329, %v338
      %v353 = vadd.f32 %v330, %v338
      %v354 = vadd.f32 %v331, %v338
      %v355 = vadd.f32 %v332, %v338
      %v356 = vmax.f32 %v340, 0.0
      %v357 = vmax.f32 %v341, 0.0
      %v358 = vmax.f32 %v342, 0.0
      %v359 = vmax.f32 %v343, 0.0
      %v360 = vmax.f32 %v344, 0.0
      %v361 = vmax.f32 %v345, 0.0
      %v362 = vmax.f32 %v346, 0.0
      %v363 = vmax.f32 %v347, 0.0
      %v364 = vmax.f32 %v348, 0.0
      %v365 = vmax.f32 %v349, 0.0
      %v366 = vmax.f32 %v350, 0.0
      %v367 = vmax.f32 %v351, 0.0
      %v368 = vmax.f32 %v352, 0.0
      %v369 = vmax.f32 %v353, 0.0
      %v370 = vmax.f32 %v354, 0.0
      %v371 = vmax.f32 %v355, 0.0
      %v372 = vpack.c.bf16 %v357, %v356
      %v373 = vpack.c.bf16 %v359, %v358
      %v374 = vpack.c.bf16 %v361, %v360
      %v375 = vpack.c.bf16 %v363, %v362
      %v376 = vpack.c.bf16 %v365, %v364
      %v377 = vpack.c.bf16 %v367, %v366
      %v378 = vpack.c.bf16 %v369, %v368
      %v379 = vpack.c.bf16 %v371, %v370
      %v388 = vunpack.c.l.b16 %v372
      %v389 = vunpack.c.h.b16 %v372
      %v390 = vunpack.c.l.b16 %v373
      %v391 = vunpack.c.h.b16 %v373
      %v392 = vunpack.c.l.b16 %v374
      %v393 = vunpack.c.h.b16 %v374
      %v394 = vunpack.c.l.b16 %v375
      %v395 = vunpack.c.h.b16 %v375
      %v396 = vunpack.c.l.b16 %v376
      %v397 = vunpack.c.h.b16 %v376
      %v398 = vunpack.c.l.b16 %v377
      %v399 = vunpack.c.h.b16 %v377
      %v400 = vunpack.c.l.b16 %v378
      %v401 = vunpack.c.h.b16 %v378
      %v402 = vunpack.c.l.b16 %v379
      %v403 = vunpack.c.h.b16 %v379
      %v404 = vpack.c.b16 %v388, %v388
      %v405 = vpack.c.b16 %v389, %v389
      %v406 = vpack.c.b16 %v390, %v390
      %v407 = vpack.c.b16 %v391, %v391
      %v408 = vpack.c.b16 %v392, %v392
      %v409 = vpack.c.b16 %v393, %v393
      %v410 = vpack.c.b16 %v394, %v394
      %v411 = vpack.c.b16 %v395, %v395
      %v412 = vpack.c.b16 %v396, %v396
      %v413 = vpack.c.b16 %v397, %v397
      %v414 = vpack.c.b16 %v398, %v398
      %v415 = vpack.c.b16 %v399, %v399
      %v416 = vpack.c.b16 %v400, %v400
      %v417 = vpack.c.b16 %v401, %v401
      %v418 = vpack.c.b16 %v402, %v402
      %v419 = vpack.c.b16 %v403, %v403
      %436 = vst [vmem:[#allocation3] sm:$0xf] %v404
      %437 = vst [vmem:[#allocation3 + $0x4] sm:$0xf] %v405
      %438 = vst [vmem:[#allocation3 + $0x8] sm:$0xf] %v406
      %439 = vst [vmem:[#allocation3 + $0xc] sm:$0xf] %v407
      %440 = vst [vmem:[#allocation3 + $0x10] sm:$0xf] %v408
      %441 = vst [vmem:[#allocation3 + $0x14] sm:$0xf] %v409
      %442 = vst [vmem:[#allocation3 + $0x18] sm:$0xf] %v410
      %443 = vst [vmem:[#allocation3 + $0x1c] sm:$0xf] %v411
      %444 = vst [vmem:[#allocation3 + $0x20] sm:$0xf] %v412
      %445 = vst [vmem:[#allocation3 + $0x24] sm:$0xf] %v413
      %446 = vst [vmem:[#allocation3 + $0x28] sm:$0xf] %v414
      %447 = vst [vmem:[#allocation3 + $0x2c] sm:$0xf] %v415
      %448 = vst [vmem:[#allocation3 + $0x30] sm:$0xf] %v416
      %449 = vst [vmem:[#allocation3 + $0x34] sm:$0xf] %v417
      %450 = vst [vmem:[#allocation3 + $0x38] sm:$0xf] %v418
      %451 = vst [vmem:[#allocation3 + $0x3c] sm:$0xf] %v419
      %v452 = vld [vmem:[%s3] sm:$0xff]
      %v453 = vld [vmem:[%s3 + $0x8] sm:$0xff]
      %v454 = vld [vmem:[%s3 + $0x10] sm:$0xff]
      %v455 = vld [vmem:[%s3 + $0x18] sm:$0xff]
      %v456 = vld [vmem:[%s3 + $0x20] sm:$0xff]
      %v457 = vld [vmem:[%s3 + $0x28] sm:$0xff]
      %v458 = vld [vmem:[%s3 + $0x30] sm:$0xff]
      %v459 = vld [vmem:[%s3 + $0x38] sm:$0xff]
      %v460 = vld [vmem:[%s3 + $0x40] sm:$0xff]
      %v461 = vld [vmem:[%s3 + $0x48] sm:$0xff]
      %v462 = vld [vmem:[%s3 + $0x50] sm:$0xff]
      %v463 = vld [vmem:[%s3 + $0x58] sm:$0xff]
      %v464 = vld [vmem:[%s3 + $0x60] sm:$0xff]
      %v465 = vld [vmem:[%s3 + $0x68] sm:$0xff]
      %v466 = vld [vmem:[%s3 + $0x70] sm:$0xff]
      %v467 = vld [vmem:[%s3 + $0x78] sm:$0xff]
      %v468 = vmul.f32 %v356, 0.33333334
      %v469 = vmul.f32 %v357, 0.33333334
      %v470 = vmul.f32 %v358, 0.33333334
      %v471 = vmul.f32 %v359, 0.33333334
      %v472 = vmul.f32 %v360, 0.33333334
      %v473 = vmul.f32 %v361, 0.33333334
      %v474 = vmul.f32 %v362, 0.33333334
      %v475 = vmul.f32 %v363, 0.33333334
      %v476 = vmul.f32 %v364, 0.33333334
      %v477 = vmul.f32 %v365, 0.33333334
      %v478 = vmul.f32 %v366, 0.33333334
      %v479 = vmul.f32 %v367, 0.33333334
      %v480 = vmul.f32 %v368, 0.33333334
      %v481 = vmul.f32 %v369, 0.33333334
      %v482 = vmul.f32 %v370, 0.33333334
      %v483 = vmul.f32 %v371, 0.33333334
      %v484 = vadd.f32 %v452, %v468
      %v485 = vadd.f32 %v453, %v469
      %v486 = vadd.f32 %v454, %v470
      %v487 = vadd.f32 %v455, %v471
      %v488 = vadd.f32 %v456, %v472
      %v489 = vadd.f32 %v457, %v473
      %v490 = vadd.f32 %v458, %v474
      %v491 = vadd.f32 %v459, %v475
      %v492 = vadd.f32 %v460, %v476
      %v493 = vadd.f32 %v461, %v477
      %v494 = vadd.f32 %v462, %v478
      %v495 = vadd.f32 %v463, %v479
      %v496 = vadd.f32 %v464, %v480
      %v497 = vadd.f32 %v465, %v481
      %v498 = vadd.f32 %v466, %v482
      %v499 = vadd.f32 %v467, %v483
      %500 = vst [vmem:[%s5] sm:$0xff] %v484
      %501 = vst [vmem:[%s5 + $0x8] sm:$0xff] %v485
      %502 = vst [vmem:[%s5 + $0x10] sm:$0xff] %v486
      %503 = vst [vmem:[%s5 + $0x18] sm:$0xff] %v487
      %504 = vst [vmem:[%s5 + $0x20] sm:$0xff] %v488
      %505 = vst [vmem:[%s5 + $0x28] sm:$0xff] %v489
      %506 = vst [vmem:[%s5 + $0x30] sm:$0xff] %v490
      %507 = vst [vmem:[%s5 + $0x38] sm:$0xff] %v491
      %508 = vst [vmem:[%s5 + $0x40] sm:$0xff] %v492
      %509 = vst [vmem:[%s5 + $0x48] sm:$0xff] %v493
      %510 = vst [vmem:[%s5 + $0x50] sm:$0xff] %v494
      %511 = vst [vmem:[%s5 + $0x58] sm:$0xff] %v495
      %512 = vst [vmem:[%s5 + $0x60] sm:$0xff] %v496
      %513 = vst [vmem:[%s5 + $0x68] sm:$0xff] %v497
      %514 = vst [vmem:[%s5 + $0x70] sm:$0xff] %v498
      %515 = vst [vmem:[%s5 + $0x78] sm:$0xff] %v499
    $region25: #{gcn_with_jk_forward.12} parent=1 // pred_fallthru
      _
    // Predicated region
    $region26: #{gcn_with_jk_forward.12} parent=1 // pred_check
      _
    $region27: #{gcn_with_jk_forward.12} parent=1 // pred_check_branch
      %517 = sbr.rel (0) target = $region29
    $region28: #{gcn_with_jk_forward.12} parent=1 // pred_region
      %s519 = ssub.s32 1024, 1024
      %520 = vsyncadd [#allocation4], %s519
      %s521 = sshll.u32 [#allocation3], 4
      %s522 = int_to_ptr.vmem [resolvable:$true] %s521
      %527 = dma.vmem_to_hbm [thread:$0]  %s522, 1024, %s4, [#allocation4], 64, 64, 4
    $region29: #{gcn_with_jk_forward.12} parent=1 // pred_fallthru
      _
    // Predicated region
    $region30: #{gcn_with_jk_forward.12} parent=1 // pred_check
      _
    $region31: #{gcn_with_jk_forward.12} parent=1 // pred_check_branch
      %529 = sbr.rel (0) target = $region33
    $region32: #{gcn_with_jk_forward.12} parent=1 // pred_region
      _
    $region33: #{gcn_with_jk_forward.12} parent=1 // pred_fallthru
      _
    // Predicated region
    $region34: #{gcn_with_jk_forward.12} parent=1 // pred_check
      _
    $region35: #{gcn_with_jk_forward.12} parent=1 // pred_check_branch
      %531 = sbr.rel (0) target = $region37
    $region36: #{gcn_with_jk_forward.12} parent=1 // pred_region
      %532 = dma.done [#allocation4], 1024
    $region37: #{gcn_with_jk_forward.12} parent=1 // pred_fallthru
      _
    // Predicated region
    $region38: #{gcn_with_jk_forward.12} parent=1 // pred_check
      _
    $region39: #{gcn_with_jk_forward.12} parent=1 // pred_check_branch
      %534 = sbr.rel (0) target = $region41
    $region40: #{gcn_with_jk_forward.12} parent=1 // pred_region
      _
    $region41: #{gcn_with_jk_forward.12} parent=1 // pred_fallthru
      _
    %535 = vsyncpa [#allocation4], 1

// kernel: gcn_with_jk_forward.13
$region0: #{gcn_with_jk_forward.13}
  #allocation0 [shape = 'u32[]', space=smem, size = 0x4, offset = 0x4, fixed_abs, tag = 'smem constant byte address 0x4 - core index']
  #allocation1 [shape = 'u32[144,128]{1,0:T(1,128)}', space=vmem, size = 0x12000, scoped, tag = 'internal scratch']
  #allocation2 [shape = 'f32[128,128]{1,0:T(8,128)}', space=vmem, size = 0x10000, scoped, tag = 'scratch operand']
  %s0 = inlined_call_operand.vmem [shape: f32[128,128], index: 0, kind: input, shape index: {}]
  %s1 = inlined_call_operand.vmem [shape: f32[128,128], index: 1, kind: input, shape index: {}]
  %s2 = inlined_call_operand.vmem [shape: f32[1,128], index: 2, kind: input, shape index: {}]
  %s3 = inlined_call_operand.vmem [shape: f32[128,128], index: 3, kind: output, shape index: {}]
  %s4 = sld [smem:[#allocation0]]
  $region30: #{gcn_with_jk_forward.13} parent=0
    _
  %s6 = ssub.s32 1, %s4
  %s7 = scalar_select 0, %s6, %s4
  // Predicated region
  $region2: #{gcn_with_jk_forward.13} parent=0 // pred_check
    _
  $region3: #{gcn_with_jk_forward.13} parent=0 // pred_check_branch
    %9 = sbr.rel (0) target = $region5
  $region4: #{gcn_with_jk_forward.13} parent=0 // pred_region
    _
  $region5: #{gcn_with_jk_forward.13} parent=0 // pred_fallthru
    _
  // Predicated region
  $region6: #{gcn_with_jk_forward.13} parent=0 // pred_check
    _
  $region7: #{gcn_with_jk_forward.13} parent=0 // pred_check_branch
    %11 = sbr.rel (0) target = $region9
  $region8: #{gcn_with_jk_forward.13} parent=0 // pred_region
    _
  $region9: #{gcn_with_jk_forward.13} parent=0 // pred_fallthru
    _
  // Predicated region
  $region10: #{gcn_with_jk_forward.13} parent=0 // pred_check
    _
  $region11: #{gcn_with_jk_forward.13} parent=0 // pred_check_branch
    %13 = sbr.rel (0) target = $region13
  $region12: #{gcn_with_jk_forward.13} parent=0 // pred_region
    _
  $region13: #{gcn_with_jk_forward.13} parent=0 // pred_fallthru
    _
  %p14 = scmp.eq.s32.totalorder 0, 0
  // Predicated region
  $region14: #{gcn_with_jk_forward.13} parent=0 // pred_check
    %p15 = pneg %p14
  $region15: #{gcn_with_jk_forward.13} parent=0 // pred_check_branch
    %17 = sbr.rel (%p15) target = $region17
  $region16: #{gcn_with_jk_forward.13} parent=0 // pred_region
    %18 = vst [vmem:[#allocation2] sm:$0xff] 0.0
    %19 = vst [vmem:[#allocation2 + $0x8] sm:$0xff] 0.0
    %20 = vst [vmem:[#allocation2 + $0x10] sm:$0xff] 0.0
    %21 = vst [vmem:[#allocation2 + $0x18] sm:$0xff] 0.0
    %22 = vst [vmem:[#allocation2 + $0x20] sm:$0xff] 0.0
    %23 = vst [vmem:[#allocation2 + $0x28] sm:$0xff] 0.0
    %24 = vst [vmem:[#allocation2 + $0x30] sm:$0xff] 0.0
    %25 = vst [vmem:[#allocation2 + $0x38] sm:$0xff] 0.0
    %26 = vst [vmem:[#allocation2 + $0x40] sm:$0xff] 0.0
    %27 = vst [vmem:[#allocation2 + $0x48] sm:$0xff] 0.0
    %28 = vst [vmem:[#allocation2 + $0x50] sm:$0xff] 0.0
    %29 = vst [vmem:[#allocation2 + $0x58] sm:$0xff] 0.0
    %30 = vst [vmem:[#allocation2 + $0x60] sm:$0xff] 0.0
    %31 = vst [vmem:[#allocation2 + $0x68] sm:$0xff] 0.0
    %32 = vst [vmem:[#allocation2 + $0x70] sm:$0xff] 0.0
    %33 = vst [vmem:[#allocation2 + $0x78] sm:$0xff] 0.0
  $region17: #{gcn_with_jk_forward.13} parent=0 // pred_fallthru
    _
  %v34 = vld [vmem:[#allocation2] sm:$0xff]
  %v35 = vld [vmem:[#allocation2 + $0x8] sm:$0xff]
  %v36 = vld [vmem:[#allocation2 + $0x10] sm:$0xff]
  %v37 = vld [vmem:[#allocation2 + $0x18] sm:$0xff]
  %v38 = vld [vmem:[#allocation2 + $0x20] sm:$0xff]
  %v39 = vld [vmem:[#allocation2 + $0x28] sm:$0xff]
  %v40 = vld [vmem:[#allocation2 + $0x30] sm:$0xff]
  %v41 = vld [vmem:[#allocation2 + $0x38] sm:$0xff]
  %v42 = vld [vmem:[#allocation2 + $0x40] sm:$0xff]
  %v43 = vld [vmem:[#allocation2 + $0x48] sm:$0xff]
  %v44 = vld [vmem:[#allocation2 + $0x50] sm:$0xff]
  %v45 = vld [vmem:[#allocation2 + $0x58] sm:$0xff]
  %v46 = vld [vmem:[#allocation2 + $0x60] sm:$0xff]
  %v47 = vld [vmem:[#allocation2 + $0x68] sm:$0xff]
  %v48 = vld [vmem:[#allocation2 + $0x70] sm:$0xff]
  %v49 = vld [vmem:[#allocation2 + $0x78] sm:$0xff]
  %v50 = vld [vmem:[%s0] sm:$0xff]
  %v51 = vld [vmem:[%s0 + $0x8] sm:$0xff]
  %v52 = vld [vmem:[%s0 + $0x10] sm:$0xff]
  %v53 = vld [vmem:[%s0 + $0x18] sm:$0xff]
  %v54 = vld [vmem:[%s0 + $0x20] sm:$0xff]
  %v55 = vld [vmem:[%s0 + $0x28] sm:$0xff]
  %v56 = vld [vmem:[%s0 + $0x30] sm:$0xff]
  %v57 = vld [vmem:[%s0 + $0x38] sm:$0xff]
  %v58 = vld [vmem:[%s0 + $0x40] sm:$0xff]
  %v59 = vld [vmem:[%s0 + $0x48] sm:$0xff]
  %v60 = vld [vmem:[%s0 + $0x50] sm:$0xff]
  %v61 = vld [vmem:[%s0 + $0x58] sm:$0xff]
  %v62 = vld [vmem:[%s0 + $0x60] sm:$0xff]
  %v63 = vld [vmem:[%s0 + $0x68] sm:$0xff]
  %v64 = vld [vmem:[%s0 + $0x70] sm:$0xff]
  %v65 = vld [vmem:[%s0 + $0x78] sm:$0xff]
  %v66 = vld [vmem:[%s1] sm:$0xff]
  %v67 = vld [vmem:[%s1 + $0x8] sm:$0xff]
  %v68 = vld [vmem:[%s1 + $0x10] sm:$0xff]
  %v69 = vld [vmem:[%s1 + $0x18] sm:$0xff]
  %v70 = vld [vmem:[%s1 + $0x20] sm:$0xff]
  %v71 = vld [vmem:[%s1 + $0x28] sm:$0xff]
  %v72 = vld [vmem:[%s1 + $0x30] sm:$0xff]
  %v73 = vld [vmem:[%s1 + $0x38] sm:$0xff]
  %v74 = vld [vmem:[%s1 + $0x40] sm:$0xff]
  %v75 = vld [vmem:[%s1 + $0x48] sm:$0xff]
  %v76 = vld [vmem:[%s1 + $0x50] sm:$0xff]
  %v77 = vld [vmem:[%s1 + $0x58] sm:$0xff]
  %v78 = vld [vmem:[%s1 + $0x60] sm:$0xff]
  %v79 = vld [vmem:[%s1 + $0x68] sm:$0xff]
  %v80 = vld [vmem:[%s1 + $0x70] sm:$0xff]
  %v81 = vld [vmem:[%s1 + $0x78] sm:$0xff]
  %82 = vmatprep.subr.mxu0 0.0
  %83 = vmatpush1.msra.mxu0 %v81
  %84 = vmatprep.subr.mxu0 0.0
  %85 = vmatpush1.msra.mxu0 %v80
  %86 = vmatprep.subr.mxu0 0.0
  %87 = vmatpush1.msra.mxu0 %v79
  %88 = vmatprep.subr.mxu0 0.0
  %89 = vmatpush1.msra.mxu0 %v78
  %90 = vmatprep.subr.mxu0 0.0
  %91 = vmatpush1.msra.mxu0 %v77
  %92 = vmatprep.subr.mxu0 0.0
  %93 = vmatpush1.msra.mxu0 %v76
  %94 = vmatprep.subr.mxu0 0.0
  %95 = vmatpush1.msra.mxu0 %v75
  %96 = vmatprep.subr.mxu0 0.0
  %97 = vmatpush1.msra.mxu0 %v74
  %98 = vmatprep.subr.mxu0 0.0
  %99 = vmatpush1.msra.mxu0 %v73
  %100 = vmatprep.subr.mxu0 0.0
  %101 = vmatpush1.msra.mxu0 %v72
  %102 = vmatprep.subr.mxu0 0.0
  %103 = vmatpush1.msra.mxu0 %v71
  %104 = vmatprep.subr.mxu0 0.0
  %105 = vmatpush1.msra.mxu0 %v70
  %106 = vmatprep.subr.mxu0 0.0
  %107 = vmatpush1.msra.mxu0 %v69
  %108 = vmatprep.subr.mxu0 0.0
  %109 = vmatpush1.msra.mxu0 %v68
  %110 = vmatprep.subr.mxu0 0.0
  %111 = vmatpush1.msra.mxu0 %v67
  %112 = vmatprep.subr.mxu0 0.0
  %113 = vmatpush1.msra.mxu0 %v66
  %114 = vmatprep.subr.mxu0 0.0
  %115 = vmatpush2.msra.mxu0 0.0
  %116 = vmatprep.subr.mxu0 0.0
  %117 = vmatpush2.msra.mxu0 0.0
  %118 = vmatprep.subr.mxu0 0.0
  %119 = vmatpush2.msra.mxu0 0.0
  %120 = vmatprep.subr.mxu0 0.0
  %121 = vmatpush2.msra.mxu0 0.0
  %122 = vmatprep.subr.mxu0 0.0
  %123 = vmatpush2.msra.mxu0 0.0
  %124 = vmatprep.subr.mxu0 0.0
  %125 = vmatpush2.msra.mxu0 0.0
  %126 = vmatprep.subr.mxu0 0.0
  %127 = vmatpush2.msra.mxu0 0.0
  %128 = vmatprep.subr.mxu0 0.0
  %129 = vmatpush2.msra.mxu0 0.0
  %130 = vmatprep.subr.mxu0 0.0
  %131 = vmatpush2.msra.mxu0 0.0
  %132 = vmatprep.subr.mxu0 0.0
  %133 = vmatpush2.msra.mxu0 0.0
  %134 = vmatprep.subr.mxu0 0.0
  %135 = vmatpush2.msra.mxu0 0.0
  %136 = vmatprep.subr.mxu0 0.0
  %137 = vmatpush2.msra.mxu0 0.0
  %138 = vmatprep.subr.mxu0 0.0
  %139 = vmatpush2.msra.mxu0 0.0
  %140 = vmatprep.subr.mxu0 0.0
  %141 = vmatpush2.msra.mxu0 0.0
  %142 = vmatprep.subr.mxu0 0.0
  %143 = vmatpush2.msra.mxu0 0.0
  %144 = vmatprep.subr.mxu0 0.0
  %145 = vmatpush2.msra.mxu0 0.0
  %146 = vmatprep.mubr.f32.mxu0 0.0
  %147 = vmatmul.mubr.f32.gmra.mxu0 %v50
  %v148 = vpop.f32.mrf.mxu0
  %v149 = vadd.f32 0.0, %v148
  %v150 = vpop.f32.mrf.mxu0
  %151 = vmatprep.mubr.f32.mxu0 0.0
  %152 = vmatmul.mubr.f32.gmra.mxu0 %v51
  %v153 = vpop.f32.mrf.mxu0
  %v154 = vadd.f32 0.0, %v153
  %v155 = vpop.f32.mrf.mxu0
  %156 = vmatprep.mubr.f32.mxu0 0.0
  %157 = vmatmul.mubr.f32.gmra.mxu0 %v52
  %v158 = vpop.f32.mrf.mxu0
  %v159 = vadd.f32 0.0, %v158
  %v160 = vpop.f32.mrf.mxu0
  %161 = vmatprep.mubr.f32.mxu0 0.0
  %162 = vmatmul.mubr.f32.gmra.mxu0 %v53
  %v163 = vpop.f32.mrf.mxu0
  %v164 = vadd.f32 0.0, %v163
  %v165 = vpop.f32.mrf.mxu0
  %166 = vmatprep.mubr.f32.mxu0 0.0
  %167 = vmatmul.mubr.f32.gmra.mxu0 %v54
  %v168 = vpop.f32.mrf.mxu0
  %v169 = vadd.f32 0.0, %v168
  %v170 = vpop.f32.mrf.mxu0
  %171 = vmatprep.mubr.f32.mxu0 0.0
  %172 = vmatmul.mubr.f32.gmra.mxu0 %v55
  %v173 = vpop.f32.mrf.mxu0
  %v174 = vadd.f32 0.0, %v173
  %v175 = vpop.f32.mrf.mxu0
  %176 = vmatprep.mubr.f32.mxu0 0.0
  %177 = vmatmul.mubr.f32.gmra.mxu0 %v56
  %v178 = vpop.f32.mrf.mxu0
  %v179 = vadd.f32 0.0, %v178
  %v180 = vpop.f32.mrf.mxu0
  %181 = vmatprep.mubr.f32.mxu0 0.0
  %182 = vmatmul.mubr.f32.gmra.mxu0 %v57
  %v183 = vpop.f32.mrf.mxu0
  %v184 = vadd.f32 0.0, %v183
  %v185 = vpop.f32.mrf.mxu0
  %186 = vmatprep.mubr.f32.mxu0 0.0
  %187 = vmatmul.mubr.f32.gmra.mxu0 %v58
  %v188 = vpop.f32.mrf.mxu0
  %v189 = vadd.f32 0.0, %v188
  %v190 = vpop.f32.mrf.mxu0
  %191 = vmatprep.mubr.f32.mxu0 0.0
  %192 = vmatmul.mubr.f32.gmra.mxu0 %v59
  %v193 = vpop.f32.mrf.mxu0
  %v194 = vadd.f32 0.0, %v193
  %v195 = vpop.f32.mrf.mxu0
  %196 = vmatprep.mubr.f32.mxu0 0.0
  %197 = vmatmul.mubr.f32.gmra.mxu0 %v60
  %v198 = vpop.f32.mrf.mxu0
  %v199 = vadd.f32 0.0, %v198
  %v200 = vpop.f32.mrf.mxu0
  %201 = vmatprep.mubr.f32.mxu0 0.0
  %202 = vmatmul.mubr.f32.gmra.mxu0 %v61
  %v203 = vpop.f32.mrf.mxu0
  %v204 = vadd.f32 0.0, %v203
  %v205 = vpop.f32.mrf.mxu0
  %206 = vmatprep.mubr.f32.mxu0 0.0
  %207 = vmatmul.mubr.f32.gmra.mxu0 %v62
  %v208 = vpop.f32.mrf.mxu0
  %v209 = vadd.f32 0.0, %v208
  %v210 = vpop.f32.mrf.mxu0
  %211 = vmatprep.mubr.f32.mxu0 0.0
  %212 = vmatmul.mubr.f32.gmra.mxu0 %v63
  %v213 = vpop.f32.mrf.mxu0
  %v214 = vadd.f32 0.0, %v213
  %v215 = vpop.f32.mrf.mxu0
  %216 = vmatprep.mubr.f32.mxu0 0.0
  %217 = vmatmul.mubr.f32.gmra.mxu0 %v64
  %v218 = vpop.f32.mrf.mxu0
  %v219 = vadd.f32 0.0, %v218
  %v220 = vpop.f32.mrf.mxu0
  %221 = vmatprep.mubr.f32.mxu0 0.0
  %222 = vmatmul.mubr.f32.gmra.mxu0 %v65
  %v223 = vpop.f32.mrf.mxu0
  %v224 = vadd.f32 0.0, %v223
  %v225 = vpop.f32.mrf.mxu0
  %226 = vdwg.mxu0
  %v227 = vadd.f32 %v34, %v149
  %v228 = vadd.f32 %v35, %v154
  %v229 = vadd.f32 %v36, %v159
  %v230 = vadd.f32 %v37, %v164
  %v231 = vadd.f32 %v38, %v169
  %v232 = vadd.f32 %v39, %v174
  %v233 = vadd.f32 %v40, %v179
  %v234 = vadd.f32 %v41, %v184
  %v235 = vadd.f32 %v42, %v189
  %v236 = vadd.f32 %v43, %v194
  %v237 = vadd.f32 %v44, %v199
  %v238 = vadd.f32 %v45, %v204
  %v239 = vadd.f32 %v46, %v209
  %v240 = vadd.f32 %v47, %v214
  %v241 = vadd.f32 %v48, %v219
  %v242 = vadd.f32 %v49, %v224
  %243 = vst [vmem:[#allocation2] sm:$0xff] %v227
  %244 = vst [vmem:[#allocation2 + $0x8] sm:$0xff] %v228
  %245 = vst [vmem:[#allocation2 + $0x10] sm:$0xff] %v229
  %246 = vst [vmem:[#allocation2 + $0x18] sm:$0xff] %v230
  %247 = vst [vmem:[#allocation2 + $0x20] sm:$0xff] %v231
  %248 = vst [vmem:[#allocation2 + $0x28] sm:$0xff] %v232
  %249 = vst [vmem:[#allocation2 + $0x30] sm:$0xff] %v233
  %250 = vst [vmem:[#allocation2 + $0x38] sm:$0xff] %v234
  %251 = vst [vmem:[#allocation2 + $0x40] sm:$0xff] %v235
  %252 = vst [vmem:[#allocation2 + $0x48] sm:$0xff] %v236
  %253 = vst [vmem:[#allocation2 + $0x50] sm:$0xff] %v237
  %254 = vst [vmem:[#allocation2 + $0x58] sm:$0xff] %v238
  %255 = vst [vmem:[#allocation2 + $0x60] sm:$0xff] %v239
  %256 = vst [vmem:[#allocation2 + $0x68] sm:$0xff] %v240
  %257 = vst [vmem:[#allocation2 + $0x70] sm:$0xff] %v241
  %258 = vst [vmem:[#allocation2 + $0x78] sm:$0xff] %v242
  // Predicated region
  $region18: #{gcn_with_jk_forward.13} parent=0 // pred_check
    %p259 = pneg %p14
  $region19: #{gcn_with_jk_forward.13} parent=0 // pred_check_branch
    %261 = sbr.rel (%p259) target = $region21
  $region20: #{gcn_with_jk_forward.13} parent=0 // pred_region
    %v262 = vld [vmem:[#allocation2] sm:$0xff]
    %v263 = vld [vmem:[#allocation2 + $0x8] sm:$0xff]
    %v264 = vld [vmem:[#allocation2 + $0x10] sm:$0xff]
    %v265 = vld [vmem:[#allocation2 + $0x18] sm:$0xff]
    %v266 = vld [vmem:[#allocation2 + $0x20] sm:$0xff]
    %v267 = vld [vmem:[#allocation2 + $0x28] sm:$0xff]
    %v268 = vld [vmem:[#allocation2 + $0x30] sm:$0xff]
    %v269 = vld [vmem:[#allocation2 + $0x38] sm:$0xff]
    %v270 = vld [vmem:[#allocation2 + $0x40] sm:$0xff]
    %v271 = vld [vmem:[#allocation2 + $0x48] sm:$0xff]
    %v272 = vld [vmem:[#allocation2 + $0x50] sm:$0xff]
    %v273 = vld [vmem:[#allocation2 + $0x58] sm:$0xff]
    %v274 = vld [vmem:[#allocation2 + $0x60] sm:$0xff]
    %v275 = vld [vmem:[#allocation2 + $0x68] sm:$0xff]
    %v276 = vld [vmem:[#allocation2 + $0x70] sm:$0xff]
    %v277 = vld [vmem:[#allocation2 + $0x78] sm:$0xff]
    %v278 = vld [vmem:[%s2] sm:$0x1]
    %v280 = vlaneseq
    %v281 = vshrl.u32 %v280, 7
    %v282 = vsub.s32 0, %v281
    %v283 = vrot.slane %v278, %v282
    %v285 = vadd.f32 %v262, %v283
    %v286 = vadd.f32 %v263, %v283
    %v287 = vadd.f32 %v264, %v283
    %v288 = vadd.f32 %v265, %v283
    %v289 = vadd.f32 %v266, %v283
    %v290 = vadd.f32 %v267, %v283
    %v291 = vadd.f32 %v268, %v283
    %v292 = vadd.f32 %v269, %v283
    %v293 = vadd.f32 %v270, %v283
    %v294 = vadd.f32 %v271, %v283
    %v295 = vadd.f32 %v272, %v283
    %v296 = vadd.f32 %v273, %v283
    %v297 = vadd.f32 %v274, %v283
    %v298 = vadd.f32 %v275, %v283
    %v299 = vadd.f32 %v276, %v283
    %v300 = vadd.f32 %v277, %v283
    %301 = vst [vmem:[%s3] sm:$0xff] %v285
    %302 = vst [vmem:[%s3 + $0x8] sm:$0xff] %v286
    %303 = vst [vmem:[%s3 + $0x10] sm:$0xff] %v287
    %304 = vst [vmem:[%s3 + $0x18] sm:$0xff] %v288
    %305 = vst [vmem:[%s3 + $0x20] sm:$0xff] %v289
    %306 = vst [vmem:[%s3 + $0x28] sm:$0xff] %v290
    %307 = vst [vmem:[%s3 + $0x30] sm:$0xff] %v291
    %308 = vst [vmem:[%s3 + $0x38] sm:$0xff] %v292
    %309 = vst [vmem:[%s3 + $0x40] sm:$0xff] %v293
    %310 = vst [vmem:[%s3 + $0x48] sm:$0xff] %v294
    %311 = vst [vmem:[%s3 + $0x50] sm:$0xff] %v295
    %312 = vst [vmem:[%s3 + $0x58] sm:$0xff] %v296
    %313 = vst [vmem:[%s3 + $0x60] sm:$0xff] %v297
    %314 = vst [vmem:[%s3 + $0x68] sm:$0xff] %v298
    %315 = vst [vmem:[%s3 + $0x70] sm:$0xff] %v299
    %316 = vst [vmem:[%s3 + $0x78] sm:$0xff] %v300
  $region21: #{gcn_with_jk_forward.13} parent=0 // pred_fallthru
    _
  // Predicated region
  $region22: #{gcn_with_jk_forward.13} parent=0 // pred_check
    _
  $region23: #{gcn_with_jk_forward.13} parent=0 // pred_check_branch
    %318 = sbr.rel (0) target = $region25
  $region24: #{gcn_with_jk_forward.13} parent=0 // pred_region
    _
  $region25: #{gcn_with_jk_forward.13} parent=0 // pred_fallthru
    _
  // Predicated region
  $region26: #{gcn_with_jk_forward.13} parent=0 // pred_check
    _
  $region27: #{gcn_with_jk_forward.13} parent=0 // pred_check_branch
    %320 = sbr.rel (0) target = $region29
  $region28: #{gcn_with_jk_forward.13} parent=0 // pred_region
    _
  $region29: #{gcn_with_jk_forward.13} parent=0 // pred_fallthru
    _

</llo_original>
